<compile_context>
chip_gen: v7x
topology: tpu7x:2x2x1
jax: 0.10.0
libtpu: 0.0.40
codegen_flags: <defaults>
</compile_context>

<pallas_src>
import jax
import jax.numpy as jnp
from jax.experimental import pallas as pl
from jax.experimental.pallas import tpu as pltpu

CONV_K = 3
IN_HW = 28
OUT_HW = IN_HW - CONV_K + 1            # 26
P = OUT_HW * OUT_HW                    # 676 conv output positions
K = CONV_K * CONV_K                    # 9 taps (single input channel)
C_OUT = 32
FC_IN = C_OUT * P                      # 21632 = 32 * 26 * 26
FC_OUT = 10


# ---------------------------------------------------------------------------
# Fused Pallas kernel: conv(im2col matmul) + bias + ReLU + NCHW-flatten FC
# ---------------------------------------------------------------------------
def _fused_kernel(patches_ref, wc_ref, bc_ref, wf_ref, bf_ref, out_ref):
    # patches_ref: (1, K, P)       wc_ref: (C_OUT, K)     bc_ref: (C_OUT, 1)
    # wf_ref: (FC_OUT, C_OUT, P)   bf_ref: (FC_OUT, 1)    out_ref: (1, FC_OUT, 1)
    patches = patches_ref[0]                                        # (K, P)

    # Conv as a lane-dense matmul: (32, 9) @ (9, 676) -> (32, 676).
    act = jnp.dot(wc_ref[...], patches,
                  preferred_element_type=jnp.float32)               # (C_OUT, P)
    act = jnp.maximum(act + bc_ref[...], 0.0)                       # bias + ReLU

    # FC without any flatten/transpose:
    #   logits[n] = sum_{c,p} wf[n, c, p] * act[c, p]  (+ bias)
    # (wf is the torch (10, 21632) weight reshaped to (10, 32, 676), which matches
    #  the NCHW flatten index c*676 + p exactly.)
    prod = wf_ref[...] * act[None, :, :]                            # (10, 32, 676)
    s = jnp.sum(prod, axis=-1)                                      # (10, 32)
    out_ref[0] = jnp.sum(s, axis=-1, keepdims=True) + bf_ref[...]   # (10, 1)


# ---------------------------------------------------------------------------
# Wrappers
# ---------------------------------------------------------------------------
def prepare_params(conv_w, conv_b, fc_w, fc_b):
    """One-time parameter preprocessing (hoisted out of the forward path)."""
    wc = conv_w.reshape(C_OUT, K)                 # (32, 9), k = dy*3 + dx
    bc = conv_b.reshape(C_OUT, 1)                 # (32, 1)
    wf = fc_w.reshape(FC_OUT, C_OUT, P)           # (10, 32, 676)
    bf = fc_b.reshape(FC_OUT, 1)                  # (10, 1)
    return wc, bc, wf, bf


def _im2col(x):
    """x: (B, 1, 28, 28) -> patches (B, K, P), k = dy*3 + dx, p = h*26 + w."""
    B = x.shape[0]
    img = x[:, 0]                                                  # (B, 28, 28)
    slabs = [img[:, dy:dy + OUT_HW, dx:dx + OUT_HW].reshape(B, P)
             for dy in range(CONV_K) for dx in range(CONV_K)]
    return jnp.stack(slabs, axis=1)                                # (B, 9, 676)


def my_custom_model(x, prepared_params):
    """x: (B, 1, 28, 28) float32 -> logits (B, 10)."""
    wc, bc, wf, bf = prepared_params
    B = x.shape[0]
    patches = _im2col(x)                                           # (B, 9, 676)

    out = pl.pallas_call(
        _fused_kernel,
        out_shape=jax.ShapeDtypeStruct((B, FC_OUT, 1), jnp.float32),
        grid_spec=pltpu.PrefetchScalarGridSpec(
            num_scalar_prefetch=0,
            grid=(B,),
            in_specs=[
                pl.BlockSpec((1, K, P), lambda b: (b, 0, 0)),          # patches
                pl.BlockSpec((C_OUT, K), lambda b: (0, 0)),            # conv W
                pl.BlockSpec((C_OUT, 1), lambda b: (0, 0)),            # conv b
                pl.BlockSpec((FC_OUT, C_OUT, P), lambda b: (0, 0, 0)),  # fc W
                pl.BlockSpec((FC_OUT, 1), lambda b: (0, 0)),           # fc b
            ],
            out_specs=pl.BlockSpec((1, FC_OUT, 1), lambda b: (b, 0, 0)),
        ),
        compiler_params=pltpu.CompilerParams(
            dimension_semantics=("parallel",)),
    )(patches, wc, bc, wf, bf)

    return out.reshape(B, FC_OUT)


# ---------------------------------------------------------------------------
# Reference (plain JAX) and synthetic init
# ---------------------------------------------------------------------------
def _reference(x, params):
    conv_w, conv_b, fc_w, fc_b = params
    y = jax.lax.conv_general_dilated(
        x, conv_w, window_strides=(1, 1), padding="VALID",
        dimension_numbers=("NCHW", "OIHW", "NCHW"))
    y = jnp.maximum(y + conv_b[None, :, None, None], 0.0)
    y = y.reshape(x.shape[0], -1)                                  # NCHW flatten
    return y @ fc_w.T + fc_b[None, :]


def init_params(key):
    """Deterministic PyTorch-flavored uniform init (synthetic weights)."""
    k1, k2, k3, k4 = jax.random.split(key, 4)
    conv_bound = 1.0 / (1 * CONV_K * CONV_K) ** 0.5
    conv_w = jax.random.uniform(k1, (C_OUT, 1, CONV_K, CONV_K),
                                jnp.float32, -conv_bound, conv_bound)
    conv_b = jax.random.uniform(k2, (C_OUT,), jnp.float32,
                                -conv_bound, conv_bound)
    fc_bound = 1.0 / FC_IN ** 0.5
    fc_w = jax.random.uniform(k3, (FC_OUT, FC_IN), jnp.float32,
                              -fc_bound, fc_bound)
    fc_b = jax.random.uniform(k4, (FC_OUT,), jnp.float32,
                              -fc_bound, fc_bound)
    return conv_w, conv_b, fc_w, fc_b


if __name__ == "__main__":
    key = jax.random.PRNGKey(0)
    k_params, k_x = jax.random.split(key)
    params = init_params(k_params)
    prepared = prepare_params(*params)          # one-time weight preprocessing
    x = jax.random.normal(k_x, (2, 1, IN_HW, IN_HW), jnp.float32)

    fwd = jax.jit(my_custom_model)
    logits = fwd(x, prepared)
    jax.block_until_ready(logits)
    assert logits.shape == (2, FC_OUT) and logits.dtype == jnp.float32

    ref = _reference(x, params)
    max_err = float(jnp.max(jnp.abs(logits - ref)))
    assert jnp.allclose(logits, ref, rtol=2e-4, atol=2e-4), max_err

    print("KERNEL_OK")
</pallas_src>

<mosaic_0001>
module attributes {stable_mosaic.version = 11 : i64} {
  func.func @_fused_kernel(%arg0: i32, %arg1: memref<1x9x676xf32, #tpu.memory_space<vmem>>, %arg2: memref<32x9xf32, #tpu.memory_space<vmem>>, %arg3: memref<32x1xf32, #tpu.memory_space<vmem>>, %arg4: memref<10x32x676xf32, #tpu.memory_space<vmem>>, %arg5: memref<10x1xf32, #tpu.memory_space<vmem>>, %arg6: memref<1x10x1xf32, #tpu.memory_space<vmem>>) attributes {dimension_semantics = [#tpu.dimension_semantics<parallel>], iteration_bounds = array<i64: 2>, scalar_prefetch = 0 : i64, scratch_operands = 0 : i64, tpu.core_type = #tpu.core_type<tc>, window_params = [{transform_indices = @transform_0, window_bounds = array<i64: 1, 9, 676>}, {pipeline_mode = #tpu.pipeline_mode<synchronous>, transform_indices = @transform_1, window_bounds = array<i64: 32, 9>}, {pipeline_mode = #tpu.pipeline_mode<synchronous>, transform_indices = @transform_2, window_bounds = array<i64: 32, 1>}, {pipeline_mode = #tpu.pipeline_mode<synchronous>, transform_indices = @transform_3, window_bounds = array<i64: 10, 32, 676>}, {pipeline_mode = #tpu.pipeline_mode<synchronous>, transform_indices = @transform_4, window_bounds = array<i64: 10, 1>}, {transform_indices = @transform_5, window_bounds = array<i64: 1, 10, 1>}]} {
    %c0 = arith.constant 0 : index
    %c0_0 = arith.constant 0 : index
    %c0_1 = arith.constant 0 : index
    %0 = vector.load %arg1[%c0, %c0_0, %c0_1] : memref<1x9x676xf32, #tpu.memory_space<vmem>>, vector<1x9x676xf32>
    %1 = vector.shape_cast %0 : vector<1x9x676xf32> to vector<9x676xf32>
    %c0_2 = arith.constant 0 : index
    %c0_3 = arith.constant 0 : index
    %2 = vector.load %arg2[%c0_2, %c0_3] : memref<32x9xf32, #tpu.memory_space<vmem>>, vector<32x9xf32>
    %cst = arith.constant dense<0.000000e+00> : vector<32x676xf32>
    %3 = tpu.matmul %2, %1, %cst {dimension_numbers = #tpu.dot_dimension_numbers<[1], [0], [0], [1], [0, 0, 1, 1], [], []>} : vector<32x9xf32>, vector<9x676xf32>, vector<32x676xf32> -> vector<32x676xf32>
    %c0_4 = arith.constant 0 : index
    %c0_5 = arith.constant 0 : index
    %4 = vector.load %arg3[%c0_4, %c0_5] : memref<32x1xf32, #tpu.memory_space<vmem>>, vector<32x1xf32>
    %5 = vector.broadcast %4 : vector<32x1xf32> to vector<32x676xf32>
    %6 = arith.addf %3, %5 : vector<32x676xf32>
    %cst_6 = arith.constant 0.000000e+00 : f32
    %7 = vector.broadcast %cst_6 : f32 to vector<32x676xf32>
    %8 = arith.maximumf %6, %7 : vector<32x676xf32>
    %c0_7 = arith.constant 0 : index
    %c0_8 = arith.constant 0 : index
    %c0_9 = arith.constant 0 : index
    %9 = vector.load %arg4[%c0_7, %c0_8, %c0_9] : memref<10x32x676xf32, #tpu.memory_space<vmem>>, vector<10x32x676xf32>
    %10 = vector.shape_cast %8 : vector<32x676xf32> to vector<1x32x676xf32>
    %11 = vector.broadcast %10 : vector<1x32x676xf32> to vector<10x32x676xf32>
    %12 = arith.mulf %9, %11 : vector<10x32x676xf32>
    %cst_10 = arith.constant dense<0.000000e+00> : vector<10x32xf32>
    %13 = vector.multi_reduction <add>, %12, %cst_10 [2] : vector<10x32x676xf32> to vector<10x32xf32>
    %cst_11 = arith.constant dense<0.000000e+00> : vector<10xf32>
    %14 = vector.multi_reduction <add>, %13, %cst_11 [1] : vector<10x32xf32> to vector<10xf32>
    %15 = vector.shape_cast %14 : vector<10xf32> to vector<10x1xf32>
    %c0_12 = arith.constant 0 : index
    %c0_13 = arith.constant 0 : index
    %16 = vector.load %arg5[%c0_12, %c0_13] : memref<10x1xf32, #tpu.memory_space<vmem>>, vector<10x1xf32>
    %17 = arith.addf %15, %16 : vector<10x1xf32>
    %c0_14 = arith.constant 0 : index
    %c0_15 = arith.constant 0 : index
    %c0_16 = arith.constant 0 : index
    %18 = vector.load %arg6[%c0_14, %c0_15, %c0_16] : memref<1x10x1xf32, #tpu.memory_space<vmem>>, vector<1x10x1xf32>
    %19 = vector.shape_cast %18 : vector<1x10x1xf32> to vector<10x1xf32>
    %20 = vector.shape_cast %17 : vector<10x1xf32> to vector<1x10x1xf32>
    tpu.vector_store %arg6[%c0_14, %c0_15, %c0_16], %20 {strides = array<i32>} : memref<1x10x1xf32, #tpu.memory_space<vmem>>, vector<1x10x1xf32>,
    return
  }
  func.func @transform_0(%arg0: i32) -> (i32, i32, i32) {
    %c0_i32 = arith.constant 0 : i32
    %c0_i32_0 = arith.constant 0 : i32
    %c0_i32_1 = arith.constant 0 : i32
    return %arg0, %c0_i32, %c0_i32_0 : i32, i32, i32
  }
  func.func @transform_1(%arg0: i32) -> (i32, i32) {
    %c0_i32 = arith.constant 0 : i32
    %c0_i32_0 = arith.constant 0 : i32
    %c0_i32_1 = arith.constant 0 : i32
    return %c0_i32, %c0_i32_0 : i32, i32
  }
  func.func @transform_2(%arg0: i32) -> (i32, i32) {
    %c0_i32 = arith.constant 0 : i32
    %c0_i32_0 = arith.constant 0 : i32
    %c0_i32_1 = arith.constant 0 : i32
    return %c0_i32, %c0_i32_0 : i32, i32
  }
  func.func @transform_3(%arg0: i32) -> (i32, i32, i32) {
    %c0_i32 = arith.constant 0 : i32
    %c0_i32_0 = arith.constant 0 : i32
    %c0_i32_1 = arith.constant 0 : i32
    %c0_i32_2 = arith.constant 0 : i32
    return %c0_i32, %c0_i32_0, %c0_i32_1 : i32, i32, i32
  }
  func.func @transform_4(%arg0: i32) -> (i32, i32) {
    %c0_i32 = arith.constant 0 : i32
    %c0_i32_0 = arith.constant 0 : i32
    %c0_i32_1 = arith.constant 0 : i32
    return %c0_i32, %c0_i32_0 : i32, i32
  }
  func.func @transform_5(%arg0: i32) -> (i32, i32, i32) {
    %c0_i32 = arith.constant 0 : i32
    %c0_i32_0 = arith.constant 0 : i32
    %c0_i32_1 = arith.constant 0 : i32
    return %arg0, %c0_i32, %c0_i32_0 : i32, i32, i32
  }
}

</mosaic_0001>

<llo_original>
// kernel: my_custom_model.1
$region0: #{my_custom_model.1}
  #allocation0 [shape = 'u32[]', space=smem, size = 0x4, offset = 0x4, fixed_abs, tag = 'smem constant byte address 0x4 - core index']
  #allocation1 [shape = 'u32[144,128]{1,0:T(1,128)}', space=vmem, size = 0x12000, scoped, tag = 'internal scratch']
  %s0 = inlined_call_operand.vmem [shape: f32[2,9,676], index: 0, kind: input, shape index: {}]
  %s1 = inlined_call_operand.vmem [shape: f32[32,9], index: 1, kind: input, shape index: {}]
  %s2 = inlined_call_operand.vmem [shape: f32[32,1], index: 2, kind: input, shape index: {}]
  %s3 = inlined_call_operand.vmem [shape: f32[10,32,676], index: 3, kind: input, shape index: {}]
  %s4 = inlined_call_operand.vmem [shape: f32[10,1], index: 4, kind: input, shape index: {}]
  %s5 = inlined_call_operand.vmem [shape: f32[2,10,1], index: 5, kind: output, shape index: {}]
  %s6 = sld [smem:[#allocation0]]
  $region53: #{my_custom_model.1} parent=0
    _
  %s8 = ssub.s32 1, %s6
  %s9 = scalar_select 0, %s8, %s6
  loop: start=0, step=1, limit=4
  $region2: #{my_custom_model.1} parent=0 // loop_pre_header
    _
  $region3: #{my_custom_model.1} parent=0 // loop_header
    %s11 = sphi 0, %s15
    %p12 = scmp.ge.s32.totalorder %s11, 4
    %s21 = sphi 0, %s23
    %s24 = sphi 0, %s21
    %s25 = sphi 0, %s24
    %s41 = sphi 0, %s25
    %s45 = sphi 0, %s45
    %s47 = sphi 0, %s45
    %s48 = sphi 0, %s47
    %s62 = sphi 0, %s48
    %s66 = sphi 0, %s66
    %s68 = sphi 0, %s66
    %s69 = sphi 0, %s68
    %s83 = sphi 0, %s69
    %s87 = sphi 0, %s87
    %s89 = sphi 0, %s87
    %s90 = sphi 0, %s89
    %s104 = sphi 0, %s90
    %s108 = sphi 0, %s108
    %s110 = sphi 0, %s108
    %s111 = sphi 0, %s110
    %s125 = sphi 0, %s111
    %s131 = sphi 0, %s133
    %s134 = sphi 0, %s131
    %s135 = sphi 0, %s134
    %s151 = sphi 0, %s135
  $region4: #{my_custom_model.1} parent=0 // loop_header_branch
    %14 = sbr.rel (%p12) target = $region8
  $region5: #{my_custom_model.1} parent=0 // loop_body
    %s16 = ssub.s32 %s11, 1
    %s17 = ssub.s32 %s11, 2
    %s18 = sadd.s32 %s11, 1
    %s19 = ssub.s32 %s11, %s18
    %p20 = scmp.eq.s32.totalorder %s19, 0
    %s22 = sadd.s32 %s21, 1
    %s23 = scalar_select %p20, %s21, %s22
    %p26 = pneg %p20
    %p27 = scmp.eq.s32.totalorder %s11, 1
    %p28 = por %p26, %p27
    %p29 = scmp.ne.s32.totalorder %s21, %s24
    %p30 = scmp.eq.s32.totalorder %s11, 0
    %p31 = por %p29, %p30
    %p32 = scmp.ne.s32.totalorder %s21, %s24
    %p33 = scmp.eq.s32.totalorder %s16, 1
    %p34 = por %p32, %p33
    %p35 = scmp.ne.s32.totalorder %s24, %s25
    %p36 = scmp.eq.s32.totalorder %s16, 0
    %p37 = por %p35, %p36
    %p38 = scmp.ne.s32.totalorder %s24, %s25
    %p39 = scmp.eq.s32.totalorder %s17, 1
    %p40 = por %p38, %p39
    %p42 = scmp.ne.s32.totalorder %s25, %s41
    %p43 = scmp.eq.s32.totalorder %s17, 0
    %p44 = por %p42, %p43
    %s46 = sadd.s32 %s45, 1
    %p49 = scmp.eq.s32.totalorder %s11, 1
    %p50 = scmp.ne.s32.totalorder %s45, %s47
    %p51 = scmp.eq.s32.totalorder %s11, 0
    %p52 = por %p50, %p51
    %p53 = scmp.ne.s32.totalorder %s45, %s47
    %p54 = scmp.eq.s32.totalorder %s16, 1
    %p55 = por %p53, %p54
    %p56 = scmp.ne.s32.totalorder %s47, %s48
    %p57 = scmp.eq.s32.totalorder %s16, 0
    %p58 = por %p56, %p57
    %p59 = scmp.ne.s32.totalorder %s47, %s48
    %p60 = scmp.eq.s32.totalorder %s17, 1
    %p61 = por %p59, %p60
    %p63 = scmp.ne.s32.totalorder %s48, %s62
    %p64 = scmp.eq.s32.totalorder %s17, 0
    %p65 = por %p63, %p64
    %s67 = sadd.s32 %s66, 1
    %p70 = scmp.eq.s32.totalorder %s11, 1
    %p71 = scmp.ne.s32.totalorder %s66, %s68
    %p72 = scmp.eq.s32.totalorder %s11, 0
    %p73 = por %p71, %p72
    %p74 = scmp.ne.s32.totalorder %s66, %s68
    %p75 = scmp.eq.s32.totalorder %s16, 1
    %p76 = por %p74, %p75
    %p77 = scmp.ne.s32.totalorder %s68, %s69
    %p78 = scmp.eq.s32.totalorder %s16, 0
    %p79 = por %p77, %p78
    %p80 = scmp.ne.s32.totalorder %s68, %s69
    %p81 = scmp.eq.s32.totalorder %s17, 1
    %p82 = por %p80, %p81
    %p84 = scmp.ne.s32.totalorder %s69, %s83
    %p85 = scmp.eq.s32.totalorder %s17, 0
    %p86 = por %p84, %p85
    %s88 = sadd.s32 %s87, 1
    %p91 = scmp.eq.s32.totalorder %s11, 1
    %p92 = scmp.ne.s32.totalorder %s87, %s89
    %p93 = scmp.eq.s32.totalorder %s11, 0
    %p94 = por %p92, %p93
    %p95 = scmp.ne.s32.totalorder %s87, %s89
    %p96 = scmp.eq.s32.totalorder %s16, 1
    %p97 = por %p95, %p96
    %p98 = scmp.ne.s32.totalorder %s89, %s90
    %p99 = scmp.eq.s32.totalorder %s16, 0
    %p100 = por %p98, %p99
    %p101 = scmp.ne.s32.totalorder %s89, %s90
    %p102 = scmp.eq.s32.totalorder %s17, 1
    %p103 = por %p101, %p102
    %p105 = scmp.ne.s32.totalorder %s90, %s104
    %p106 = scmp.eq.s32.totalorder %s17, 0
    %p107 = por %p105, %p106
    %s109 = sadd.s32 %s108, 1
    %p112 = scmp.eq.s32.totalorder %s11, 1
    %p113 = scmp.ne.s32.totalorder %s108, %s110
    %p114 = scmp.eq.s32.totalorder %s11, 0
    %p115 = por %p113, %p114
    %p116 = scmp.ne.s32.totalorder %s108, %s110
    %p117 = scmp.eq.s32.totalorder %s16, 1
    %p118 = por %p116, %p117
    %p119 = scmp.ne.s32.totalorder %s110, %s111
    %p120 = scmp.eq.s32.totalorder %s16, 0
    %p121 = por %p119, %p120
    %p122 = scmp.ne.s32.totalorder %s110, %s111
    %p123 = scmp.eq.s32.totalorder %s17, 1
    %p124 = por %p122, %p123
    %p126 = scmp.ne.s32.totalorder %s111, %s125
    %p127 = scmp.eq.s32.totalorder %s17, 0
    %p128 = por %p126, %p127
    %s129 = ssub.s32 %s11, %s18
    %p130 = scmp.eq.s32.totalorder %s129, 0
    %s132 = sadd.s32 %s131, 1
    %s133 = scalar_select %p130, %s131, %s132
    %p136 = pneg %p130
    %p137 = scmp.eq.s32.totalorder %s11, 1
    %p138 = por %p136, %p137
    %p139 = scmp.ne.s32.totalorder %s131, %s134
    %p140 = scmp.eq.s32.totalorder %s11, 0
    %p141 = por %p139, %p140
    %p142 = scmp.ne.s32.totalorder %s131, %s134
    %p143 = scmp.eq.s32.totalorder %s16, 1
    %p144 = por %p142, %p143
    %p145 = scmp.ne.s32.totalorder %s134, %s135
    %p146 = scmp.eq.s32.totalorder %s16, 0
    %p147 = por %p145, %p146
    %p148 = scmp.ne.s32.totalorder %s134, %s135
    %p149 = scmp.eq.s32.totalorder %s17, 1
    %p150 = por %p148, %p149
    %p152 = scmp.ne.s32.totalorder %s135, %s151
    %p153 = scmp.eq.s32.totalorder %s17, 0
    %p154 = por %p152, %p153
    %p155 = scmp.le.s32.totalorder 1, %s11
    %p156 = scmp.lt.s32.totalorder %s11, 3
    %p157 = pnand %p155, %p156
    %p158 = pneg %p157
    // Predicated region
    $region9: #{my_custom_model.1} parent=5 // pred_check
      _
    $region10: #{my_custom_model.1} parent=5 // pred_check_branch
      %160 = sbr.rel (%p157) target = $region12
    $region11: #{my_custom_model.1} parent=5 // pred_region
      %s161 = ssub.s32 %s11, 1
      // Predicated region
      $region13: #{my_custom_model.1} parent=11 // pred_check
        %p162 = pneg %p58
      $region14: #{my_custom_model.1} parent=11 // pred_check_branch
        %164 = sbr.rel (%p162) target = $region16
      $region15: #{my_custom_model.1} parent=11 // pred_region
        _
      $region16: #{my_custom_model.1} parent=11 // pred_fallthru
        _
      // Predicated region
      $region17: #{my_custom_model.1} parent=11 // pred_check
        %p165 = pneg %p79
      $region18: #{my_custom_model.1} parent=11 // pred_check_branch
        %167 = sbr.rel (%p165) target = $region20
      $region19: #{my_custom_model.1} parent=11 // pred_region
        _
      $region20: #{my_custom_model.1} parent=11 // pred_fallthru
        _
      // Predicated region
      $region21: #{my_custom_model.1} parent=11 // pred_check
        %p168 = pneg %p100
      $region22: #{my_custom_model.1} parent=11 // pred_check_branch
        %170 = sbr.rel (%p168) target = $region24
      $region23: #{my_custom_model.1} parent=11 // pred_region
        _
      $region24: #{my_custom_model.1} parent=11 // pred_fallthru
        _
      // Predicated region
      $region25: #{my_custom_model.1} parent=11 // pred_check
        %p171 = pneg %p121
      $region26: #{my_custom_model.1} parent=11 // pred_check_branch
        %173 = sbr.rel (%p171) target = $region28
      $region27: #{my_custom_model.1} parent=11 // pred_region
        _
      $region28: #{my_custom_model.1} parent=11 // pred_fallthru
        _
    $region12: #{my_custom_model.1} parent=5 // pred_fallthru
      _
    %p174 = scmp.lt.s32.totalorder %s11, 2
    // Predicated region
    $region29: #{my_custom_model.1} parent=5 // pred_check
      %p175 = pneg %p174
    $region30: #{my_custom_model.1} parent=5 // pred_check_branch
      %177 = sbr.rel (%p175) target = $region32
    $region31: #{my_custom_model.1} parent=5 // pred_region
      // Predicated region
      $region33: #{my_custom_model.1} parent=31 // pred_check
        %p178 = pneg %p31
      $region34: #{my_custom_model.1} parent=31 // pred_check_branch
        %180 = sbr.rel (%p178) target = $region36
      $region35: #{my_custom_model.1} parent=31 // pred_region
        %p181 = scmp.lt.s32.totalorder %s11, 1
        %s182 = scalar_select %p181, %s11, 1
        %s183 = smul.addr %s182, 12
        %s184 = smul.addr %s183, 8
        %s185 = scalar_lea.vmem %s0, %s184
      $region36: #{my_custom_model.1} parent=31 // pred_fallthru
        _
    $region32: #{my_custom_model.1} parent=5 // pred_fallthru
      _
    %p186 = scmp.le.s32.totalorder 1, %s11
    %p187 = scmp.lt.s32.totalorder %s11, 3
    %p188 = pnand %p186, %p187
    %p189 = pneg %p188
    // Predicated region
    $region37: #{my_custom_model.1} parent=5 // pred_check
      _
    $region38: #{my_custom_model.1} parent=5 // pred_check_branch
      %191 = sbr.rel (%p188) target = $region40
    $region39: #{my_custom_model.1} parent=5 // pred_region
      %s192 = ssub.s32 %s11, 1
      %p193 = scmp.lt.s32.totalorder %s16, 1
      %s194 = scalar_select %p193, %s16, 1
      %s195 = smul.addr %s194, 12
      %s196 = smul.addr %s195, 8
      %s197 = scalar_lea.vmem %s0, %s196
      %p198 = pneg %p37
      %p199 = pneg %p34
      %p200 = pneg %p58
      %p201 = pneg %p55
      %p202 = pneg %p79
      %p203 = pneg %p76
      %p204 = pneg %p100
      %p205 = pneg %p97
      %p206 = pneg %p121
      %p207 = pneg %p118
      %p208 = pneg %p147
      %p209 = pneg %p144
      %p210 = scmp.lt.s32.totalorder %s16, 1
      %s211 = scalar_select %p210, %s16, 1
      %s212 = smul.addr %s211, 2
      %s213 = smul.addr %s212, 8
      %s214 = scalar_lea.vmem %s5, %s213
      %p215 = scmp.lt.s32.totalorder %s16, 1
      %s216 = scalar_select %p215, %s16, 1
      %s217 = smul.addr %s216, 12
      %s218 = smul.addr %s217, 8
      %s219 = scalar_lea.vmem %s0, %s218
      %p220 = scmp.lt.s32.totalorder %s16, 1
      %s221 = scalar_select %p220, %s16, 1
      %s222 = smul.addr %s221, 2
      %s223 = smul.addr %s222, 8
      %s224 = scalar_lea.vmem %s5, %s223
      %v225 = vld [vmem:[%s219] sm:$0xff]
      %v226 = vld [vmem:[%s219 + $0x8] sm:$0xff]
      %v227 = vld [vmem:[%s219 + $0x10] sm:$0xff]
      %v228 = vld [vmem:[%s219 + $0x18] sm:$0xff]
      %v229 = vld [vmem:[%s219 + $0x20] sm:$0xff]
      %v230 = vld [vmem:[%s219 + $0x28] sm:$0xff]
      %v231 = vld [vmem:[%s219 + $0x30] sm:$0x1]
      %v232 = vld [vmem:[%s219 + $0x38] sm:$0x1]
      %v233 = vld [vmem:[%s219 + $0x40] sm:$0x1]
      %v234 = vld [vmem:[%s219 + $0x48] sm:$0x1]
      %v235 = vld [vmem:[%s219 + $0x50] sm:$0x1]
      %v236 = vld [vmem:[%s219 + $0x58] sm:$0x1]
      %v237 = vld [vmem:[%s1] sm:$0xff]
      %v238 = vld [vmem:[%s1 + $0x8] sm:$0xff]
      %v239 = vld [vmem:[%s1 + $0x10] sm:$0xff]
      %v240 = vld [vmem:[%s1 + $0x18] sm:$0xff]
      %v241 = vld [vmem:[%s2] sm:$0xff]
      %v242 = vld [vmem:[%s2 + $0x8] sm:$0xff]
      %v243 = vld [vmem:[%s2 + $0x10] sm:$0xff]
      %v244 = vld [vmem:[%s2 + $0x18] sm:$0xff]
      %246 = vset.pattern.permute.xlu0 0
      %247 = vperm.xlu0 %246, %v241
      %v248 = vpop.permute.xlu0 %247
      %251 = vset.pattern.permute.xlu0 0
      %252 = vperm.xlu0 %251, %v242
      %v253 = vpop.permute.xlu0 %252
      %256 = vset.pattern.permute.xlu0 0
      %257 = vperm.xlu0 %256, %v243
      %v258 = vpop.permute.xlu0 %257
      %261 = vset.pattern.permute.xlu0 0
      %262 = vperm.xlu0 %261, %v244
      %v263 = vpop.permute.xlu0 %262
      %vm265 = vcmask 72704
      %v267 = vsel %vm265, %v237, 0
      %v270 = vsel %vm265, %v238, 0
      %v273 = vsel %vm265, %v239, 0
      %v276 = vsel %vm265, %v240, 0
      %vm278 = vcmask 1040384
      %v280 = vsel %vm278, %v231, 0
      %v283 = vsel %vm278, %v232, 0
      %v286 = vsel %vm278, %v233, 0
      %v289 = vsel %vm278, %v234, 0
      %v292 = vsel %vm278, %v235, 0
      %v295 = vsel %vm278, %v236, 0
      %297 = vmatprep.subr.mxu0 %v226
      %298 = vmatpush1.msra.mxu0 %v225
      %299 = vmatprep.subr.mxu0 %v283
      %300 = vmatpush1.msra.mxu0 %v280
      %301 = vmatprep.subr.mxu0 0.0
      %302 = vmatpush1.msra.mxu0 0.0
      %303 = vmatprep.subr.mxu0 0.0
      %304 = vmatpush1.msra.mxu0 0.0
      %305 = vmatprep.subr.mxu0 0.0
      %306 = vmatpush1.msra.mxu0 0.0
      %307 = vmatprep.subr.mxu0 0.0
      %308 = vmatpush1.msra.mxu0 0.0
      %309 = vmatprep.subr.mxu0 0.0
      %310 = vmatpush1.msra.mxu0 0.0
      %311 = vmatprep.subr.mxu0 0.0
      %312 = vmatpush1.msra.mxu0 0.0
      %313 = vmatprep.subr.mxu0 0.0
      %314 = vmatpush1.msra.mxu0 0.0
      %315 = vmatprep.subr.mxu0 0.0
      %316 = vmatpush1.msra.mxu0 0.0
      %317 = vmatprep.subr.mxu0 0.0
      %318 = vmatpush1.msra.mxu0 0.0
      %319 = vmatprep.subr.mxu0 0.0
      %320 = vmatpush1.msra.mxu0 0.0
      %321 = vmatprep.subr.mxu0 0.0
      %322 = vmatpush1.msra.mxu0 0.0
      %323 = vmatprep.subr.mxu0 0.0
      %324 = vmatpush1.msra.mxu0 0.0
      %325 = vmatprep.subr.mxu0 0.0
      %326 = vmatpush1.msra.mxu0 0.0
      %327 = vmatprep.subr.mxu0 0.0
      %328 = vmatpush1.msra.mxu0 0.0
      %329 = vmatprep.subr.mxu0 0.0
      %330 = vmatpush1.msra.mxu0 0.0
      %331 = vmatprep.subr.mxu0 0.0
      %332 = vmatpush1.msra.mxu0 0.0
      %333 = vmatprep.subr.mxu0 0.0
      %334 = vmatpush1.msra.mxu0 0.0
      %335 = vmatprep.subr.mxu0 0.0
      %336 = vmatpush1.msra.mxu0 0.0
      %337 = vmatprep.subr.mxu0 0.0
      %338 = vmatpush1.msra.mxu0 0.0
      %339 = vmatprep.subr.mxu0 0.0
      %340 = vmatpush1.msra.mxu0 0.0
      %341 = vmatprep.subr.mxu0 0.0
      %342 = vmatpush1.msra.mxu0 0.0
      %343 = vmatprep.subr.mxu0 0.0
      %344 = vmatpush1.msra.mxu0 0.0
      %345 = vmatprep.subr.mxu0 0.0
      %346 = vmatpush1.msra.mxu0 0.0
      %347 = vmatprep.subr.mxu0 0.0
      %348 = vmatpush1.msra.mxu0 0.0
      %349 = vmatprep.subr.mxu0 0.0
      %350 = vmatpush1.msra.mxu0 0.0
      %351 = vmatprep.subr.mxu0 0.0
      %352 = vmatpush1.msra.mxu0 0.0
      %353 = vmatprep.subr.mxu0 0.0
      %354 = vmatpush1.msra.mxu0 0.0
      %355 = vmatprep.subr.mxu0 0.0
      %356 = vmatpush1.msra.mxu0 0.0
      %357 = vmatprep.subr.mxu0 0.0
      %358 = vmatpush1.msra.mxu0 0.0
      %359 = vmatprep.subr.mxu0 0.0
      %360 = vmatpush1.msra.mxu0 0.0
      %361 = vmatprep.mubr.f32.mxu0 0.0
      %362 = vmatmul.mubr.f32.gmra.mrb[0].mxu0 %v267
      %v363 = vpop.f32.mrb[0].mxu0
      %v364 = vadd.f32 %v248, %v363
      %v365 = vpop.f32.mrb[0].mxu0
      %v366 = vadd.f32 %v248, %v365
      %367 = vmatprep.mubr.f32.mxu0 0.0
      %368 = vmatmul.mubr.f32.gmra.mrb[0].mxu0 %v270
      %v369 = vpop.f32.mrb[0].mxu0
      %v370 = vadd.f32 %v253, %v369
      %v371 = vpop.f32.mrb[0].mxu0
      %v372 = vadd.f32 %v253, %v371
      %373 = vmatprep.mubr.f32.mxu0 0.0
      %374 = vmatmul.mubr.f32.gmra.mrb[0].mxu0 %v273
      %v375 = vpop.f32.mrb[0].mxu0
      %v376 = vadd.f32 %v258, %v375
      %v377 = vpop.f32.mrb[0].mxu0
      %v378 = vadd.f32 %v258, %v377
      %379 = vmatprep.mubr.f32.mxu0 0.0
      %380 = vmatmul.mubr.f32.gmra.mrb[0].mxu0 %v276
      %v381 = vpop.f32.mrb[0].mxu0
      %v382 = vadd.f32 %v263, %v381
      %v383 = vpop.f32.mrb[0].mxu0
      %v384 = vadd.f32 %v263, %v383
      %385 = vdwg.mxu0
      %386 = vmatprep.subr.mxu0 %v228
      %387 = vmatpush1.msra.mxu0 %v227
      %388 = vmatprep.subr.mxu0 %v289
      %389 = vmatpush1.msra.mxu0 %v286
      %390 = vmatprep.subr.mxu0 0.0
      %391 = vmatpush1.msra.mxu0 0.0
      %392 = vmatprep.subr.mxu0 0.0
      %393 = vmatpush1.msra.mxu0 0.0
      %394 = vmatprep.subr.mxu0 0.0
      %395 = vmatpush1.msra.mxu0 0.0
      %396 = vmatprep.subr.mxu0 0.0
      %397 = vmatpush1.msra.mxu0 0.0
      %398 = vmatprep.subr.mxu0 0.0
      %399 = vmatpush1.msra.mxu0 0.0
      %400 = vmatprep.subr.mxu0 0.0
      %401 = vmatpush1.msra.mxu0 0.0
      %402 = vmatprep.subr.mxu0 0.0
      %403 = vmatpush1.msra.mxu0 0.0
      %404 = vmatprep.subr.mxu0 0.0
      %405 = vmatpush1.msra.mxu0 0.0
      %406 = vmatprep.subr.mxu0 0.0
      %407 = vmatpush1.msra.mxu0 0.0
      %408 = vmatprep.subr.mxu0 0.0
      %409 = vmatpush1.msra.mxu0 0.0
      %410 = vmatprep.subr.mxu0 0.0
      %411 = vmatpush1.msra.mxu0 0.0
      %412 = vmatprep.subr.mxu0 0.0
      %413 = vmatpush1.msra.mxu0 0.0
      %414 = vmatprep.subr.mxu0 0.0
      %415 = vmatpush1.msra.mxu0 0.0
      %416 = vmatprep.subr.mxu0 0.0
      %417 = vmatpush1.msra.mxu0 0.0
      %418 = vmatprep.subr.mxu0 0.0
      %419 = vmatpush1.msra.mxu0 0.0
      %420 = vmatprep.subr.mxu0 0.0
      %421 = vmatpush1.msra.mxu0 0.0
      %422 = vmatprep.subr.mxu0 0.0
      %423 = vmatpush1.msra.mxu0 0.0
      %424 = vmatprep.subr.mxu0 0.0
      %425 = vmatpush1.msra.mxu0 0.0
      %426 = vmatprep.subr.mxu0 0.0
      %427 = vmatpush1.msra.mxu0 0.0
      %428 = vmatprep.subr.mxu0 0.0
      %429 = vmatpush1.msra.mxu0 0.0
      %430 = vmatprep.subr.mxu0 0.0
      %431 = vmatpush1.msra.mxu0 0.0
      %432 = vmatprep.subr.mxu0 0.0
      %433 = vmatpush1.msra.mxu0 0.0
      %434 = vmatprep.subr.mxu0 0.0
      %435 = vmatpush1.msra.mxu0 0.0
      %436 = vmatprep.subr.mxu0 0.0
      %437 = vmatpush1.msra.mxu0 0.0
      %438 = vmatprep.subr.mxu0 0.0
      %439 = vmatpush1.msra.mxu0 0.0
      %440 = vmatprep.subr.mxu0 0.0
      %441 = vmatpush1.msra.mxu0 0.0
      %442 = vmatprep.subr.mxu0 0.0
      %443 = vmatpush1.msra.mxu0 0.0
      %444 = vmatprep.subr.mxu0 0.0
      %445 = vmatpush1.msra.mxu0 0.0
      %446 = vmatprep.subr.mxu0 0.0
      %447 = vmatpush1.msra.mxu0 0.0
      %448 = vmatprep.subr.mxu0 0.0
      %449 = vmatpush1.msra.mxu0 0.0
      %450 = vmatprep.mubr.f32.mxu0 0.0
      %451 = vmatmul.mubr.f32.gmra.mrb[0].mxu0 %v267
      %v452 = vpop.f32.mrb[0].mxu0
      %v453 = vadd.f32 %v248, %v452
      %v454 = vpop.f32.mrb[0].mxu0
      %v455 = vadd.f32 %v248, %v454
      %456 = vmatprep.mubr.f32.mxu0 0.0
      %457 = vmatmul.mubr.f32.gmra.mrb[0].mxu0 %v270
      %v458 = vpop.f32.mrb[0].mxu0
      %v459 = vadd.f32 %v253, %v458
      %v460 = vpop.f32.mrb[0].mxu0
      %v461 = vadd.f32 %v253, %v460
      %462 = vmatprep.mubr.f32.mxu0 0.0
      %463 = vmatmul.mubr.f32.gmra.mrb[0].mxu0 %v273
      %v464 = vpop.f32.mrb[0].mxu0
      %v465 = vadd.f32 %v258, %v464
      %v466 = vpop.f32.mrb[0].mxu0
      %v467 = vadd.f32 %v258, %v466
      %468 = vmatprep.mubr.f32.mxu0 0.0
      %469 = vmatmul.mubr.f32.gmra.mrb[0].mxu0 %v276
      %v470 = vpop.f32.mrb[0].mxu0
      %v471 = vadd.f32 %v263, %v470
      %v472 = vpop.f32.mrb[0].mxu0
      %v473 = vadd.f32 %v263, %v472
      %474 = vdwg.mxu0
      %475 = vmatprep.subr.mxu0 %v230
      %476 = vmatpush1.msra.mxu0 %v229
      %477 = vmatprep.subr.mxu0 %v295
      %478 = vmatpush1.msra.mxu0 %v292
      %479 = vmatprep.subr.mxu0 0.0
      %480 = vmatpush1.msra.mxu0 0.0
      %481 = vmatprep.subr.mxu0 0.0
      %482 = vmatpush1.msra.mxu0 0.0
      %483 = vmatprep.subr.mxu0 0.0
      %484 = vmatpush1.msra.mxu0 0.0
      %485 = vmatprep.subr.mxu0 0.0
      %486 = vmatpush1.msra.mxu0 0.0
      %487 = vmatprep.subr.mxu0 0.0
      %488 = vmatpush1.msra.mxu0 0.0
      %489 = vmatprep.subr.mxu0 0.0
      %490 = vmatpush1.msra.mxu0 0.0
      %491 = vmatprep.subr.mxu0 0.0
      %492 = vmatpush1.msra.mxu0 0.0
      %493 = vmatprep.subr.mxu0 0.0
      %494 = vmatpush1.msra.mxu0 0.0
      %495 = vmatprep.subr.mxu0 0.0
      %496 = vmatpush1.msra.mxu0 0.0
      %497 = vmatprep.subr.mxu0 0.0
      %498 = vmatpush1.msra.mxu0 0.0
      %499 = vmatprep.subr.mxu0 0.0
      %500 = vmatpush1.msra.mxu0 0.0
      %501 = vmatprep.subr.mxu0 0.0
      %502 = vmatpush1.msra.mxu0 0.0
      %503 = vmatprep.subr.mxu0 0.0
      %504 = vmatpush1.msra.mxu0 0.0
      %505 = vmatprep.subr.mxu0 0.0
      %506 = vmatpush1.msra.mxu0 0.0
      %507 = vmatprep.subr.mxu0 0.0
      %508 = vmatpush1.msra.mxu0 0.0
      %509 = vmatprep.subr.mxu0 0.0
      %510 = vmatpush1.msra.mxu0 0.0
      %511 = vmatprep.subr.mxu0 0.0
      %512 = vmatpush1.msra.mxu0 0.0
      %513 = vmatprep.subr.mxu0 0.0
      %514 = vmatpush1.msra.mxu0 0.0
      %515 = vmatprep.subr.mxu0 0.0
      %516 = vmatpush1.msra.mxu0 0.0
      %517 = vmatprep.subr.mxu0 0.0
      %518 = vmatpush1.msra.mxu0 0.0
      %519 = vmatprep.subr.mxu0 0.0
      %520 = vmatpush1.msra.mxu0 0.0
      %521 = vmatprep.subr.mxu0 0.0
      %522 = vmatpush1.msra.mxu0 0.0
      %523 = vmatprep.subr.mxu0 0.0
      %524 = vmatpush1.msra.mxu0 0.0
      %525 = vmatprep.subr.mxu0 0.0
      %526 = vmatpush1.msra.mxu0 0.0
      %527 = vmatprep.subr.mxu0 0.0
      %528 = vmatpush1.msra.mxu0 0.0
      %529 = vmatprep.subr.mxu0 0.0
      %530 = vmatpush1.msra.mxu0 0.0
      %531 = vmatprep.subr.mxu0 0.0
      %532 = vmatpush1.msra.mxu0 0.0
      %533 = vmatprep.subr.mxu0 0.0
      %534 = vmatpush1.msra.mxu0 0.0
      %535 = vmatprep.subr.mxu0 0.0
      %536 = vmatpush1.msra.mxu0 0.0
      %537 = vmatprep.subr.mxu0 0.0
      %538 = vmatpush1.msra.mxu0 0.0
      %539 = vmatprep.mubr.f32.mxu0 0.0
      %540 = vmatmul.mubr.f32.gmra.mrb[0].mxu0 %v267
      %v541 = vpop.f32.mrb[0].mxu0
      %v542 = vadd.f32 %v248, %v541
      %v543 = vpop.f32.mrb[0].mxu0
      %v544 = vadd.f32 %v248, %v543
      %545 = vmatprep.mubr.f32.mxu0 0.0
      %546 = vmatmul.mubr.f32.gmra.mrb[0].mxu0 %v270
      %v547 = vpop.f32.mrb[0].mxu0
      %v548 = vadd.f32 %v253, %v547
      %v549 = vpop.f32.mrb[0].mxu0
      %v550 = vadd.f32 %v253, %v549
      %551 = vmatprep.mubr.f32.mxu0 0.0
      %552 = vmatmul.mubr.f32.gmra.mrb[0].mxu0 %v273
      %v553 = vpop.f32.mrb[0].mxu0
      %v554 = vadd.f32 %v258, %v553
      %v555 = vpop.f32.mrb[0].mxu0
      %v556 = vadd.f32 %v258, %v555
      %557 = vmatprep.mubr.f32.mxu0 0.0
      %558 = vmatmul.mubr.f32.gmra.mrb[0].mxu0 %v276
      %v559 = vpop.f32.mrb[0].mxu0
      %v560 = vadd.f32 %v263, %v559
      %v561 = vpop.f32.mrb[0].mxu0
      %v562 = vadd.f32 %v263, %v561
      %563 = vdwg.mxu0
      %v564 = vmax.f32 %v364, 0.0
      %v565 = vmax.f32 %v366, 0.0
      %v566 = vmax.f32 %v453, 0.0
      %v567 = vmax.f32 %v455, 0.0
      %v568 = vmax.f32 %v542, 0.0
      %v569 = vmax.f32 %v544, 0.0
      %v570 = vmax.f32 %v370, 0.0
      %v571 = vmax.f32 %v372, 0.0
      %v572 = vmax.f32 %v459, 0.0
      %v573 = vmax.f32 %v461, 0.0
      %v574 = vmax.f32 %v548, 0.0
      %v575 = vmax.f32 %v550, 0.0
      %v576 = vmax.f32 %v376, 0.0
      %v577 = vmax.f32 %v378, 0.0
      %v578 = vmax.f32 %v465, 0.0
      %v579 = vmax.f32 %v467, 0.0
      %v580 = vmax.f32 %v554, 0.0
      %v581 = vmax.f32 %v556, 0.0
      %v582 = vmax.f32 %v382, 0.0
      %v583 = vmax.f32 %v384, 0.0
      %v584 = vmax.f32 %v471, 0.0
      %v585 = vmax.f32 %v473, 0.0
      %v586 = vmax.f32 %v560, 0.0
      %v587 = vmax.f32 %v562, 0.0
      %v588 = vld [vmem:[%s3] sm:$0xff]
      %v589 = vld [vmem:[%s3 + $0x8] sm:$0xff]
      %v590 = vld [vmem:[%s3 + $0x10] sm:$0xff]
      %v591 = vld [vmem:[%s3 + $0x18] sm:$0xff]
      %v592 = vld [vmem:[%s3 + $0x20] sm:$0xff]
      %v593 = vld [vmem:[%s3 + $0x28] sm:$0xff]
      %v594 = vld [vmem:[%s3 + $0x30] sm:$0xff]
      %v595 = vld [vmem:[%s3 + $0x38] sm:$0xff]
      %v596 = vld [vmem:[%s3 + $0x40] sm:$0xff]
      %v597 = vld [vmem:[%s3 + $0x48] sm:$0xff]
      %v598 = vld [vmem:[%s3 + $0x50] sm:$0xff]
      %v599 = vld [vmem:[%s3 + $0x58] sm:$0xff]
      %v600 = vld [vmem:[%s3 + $0x60] sm:$0xff]
      %v601 = vld [vmem:[%s3 + $0x68] sm:$0xff]
      %v602 = vld [vmem:[%s3 + $0x70] sm:$0xff]
      %v603 = vld [vmem:[%s3 + $0x78] sm:$0xff]
      %v604 = vld [vmem:[%s3 + $0x80] sm:$0xff]
      %v605 = vld [vmem:[%s3 + $0x88] sm:$0xff]
      %v606 = vld [vmem:[%s3 + $0x90] sm:$0xff]
      %v607 = vld [vmem:[%s3 + $0x98] sm:$0xff]
      %v608 = vld [vmem:[%s3 + $0xa0] sm:$0xff]
      %v609 = vld [vmem:[%s3 + $0xa8] sm:$0xff]
      %v610 = vld [vmem:[%s3 + $0xb0] sm:$0xff]
      %v611 = vld [vmem:[%s3 + $0xb8] sm:$0xff]
      %v612 = vld [vmem:[%s3 + $0xc0] sm:$0xff]
      %v613 = vld [vmem:[%s3 + $0xc8] sm:$0xff]
      %v614 = vld [vmem:[%s3 + $0xd0] sm:$0xff]
      %v615 = vld [vmem:[%s3 + $0xd8] sm:$0xff]
      %v616 = vld [vmem:[%s3 + $0xe0] sm:$0xff]
      %v617 = vld [vmem:[%s3 + $0xe8] sm:$0xff]
      %v618 = vld [vmem:[%s3 + $0xf0] sm:$0xff]
      %v619 = vld [vmem:[%s3 + $0xf8] sm:$0xff]
      %v620 = vld [vmem:[%s3 + $0x100] sm:$0xff]
      %v621 = vld [vmem:[%s3 + $0x108] sm:$0xff]
      %v622 = vld [vmem:[%s3 + $0x110] sm:$0xff]
      %v623 = vld [vmem:[%s3 + $0x118] sm:$0xff]
      %v624 = vld [vmem:[%s3 + $0x120] sm:$0xff]
      %v625 = vld [vmem:[%s3 + $0x128] sm:$0xff]
      %v626 = vld [vmem:[%s3 + $0x130] sm:$0xff]
      %v627 = vld [vmem:[%s3 + $0x138] sm:$0xff]
      %v628 = vld [vmem:[%s3 + $0x140] sm:$0xff]
      %v629 = vld [vmem:[%s3 + $0x148] sm:$0xff]
      %v630 = vld [vmem:[%s3 + $0x150] sm:$0xff]
      %v631 = vld [vmem:[%s3 + $0x158] sm:$0xff]
      %v632 = vld [vmem:[%s3 + $0x160] sm:$0xff]
      %v633 = vld [vmem:[%s3 + $0x168] sm:$0xff]
      %v634 = vld [vmem:[%s3 + $0x170] sm:$0xff]
      %v635 = vld [vmem:[%s3 + $0x178] sm:$0xff]
      %v636 = vld [vmem:[%s3 + $0x180] sm:$0xff]
      %v637 = vld [vmem:[%s3 + $0x188] sm:$0xff]
      %v638 = vld [vmem:[%s3 + $0x190] sm:$0xff]
      %v639 = vld [vmem:[%s3 + $0x198] sm:$0xff]
      %v640 = vld [vmem:[%s3 + $0x1a0] sm:$0xff]
      %v641 = vld [vmem:[%s3 + $0x1a8] sm:$0xff]
      %v642 = vld [vmem:[%s3 + $0x1b0] sm:$0xff]
      %v643 = vld [vmem:[%s3 + $0x1b8] sm:$0xff]
      %v644 = vld [vmem:[%s3 + $0x1c0] sm:$0xff]
      %v645 = vld [vmem:[%s3 + $0x1c8] sm:$0xff]
      %v646 = vld [vmem:[%s3 + $0x1d0] sm:$0xff]
      %v647 = vld [vmem:[%s3 + $0x1d8] sm:$0xff]
      %v648 = vld [vmem:[%s3 + $0x1e0] sm:$0xff]
      %v649 = vld [vmem:[%s3 + $0x1e8] sm:$0xff]
      %v650 = vld [vmem:[%s3 + $0x1f0] sm:$0xff]
      %v651 = vld [vmem:[%s3 + $0x1f8] sm:$0xff]
      %v652 = vld [vmem:[%s3 + $0x200] sm:$0xff]
      %v653 = vld [vmem:[%s3 + $0x208] sm:$0xff]
      %v654 = vld [vmem:[%s3 + $0x210] sm:$0xff]
      %v655 = vld [vmem:[%s3 + $0x218] sm:$0xff]
      %v656 = vld [vmem:[%s3 + $0x220] sm:$0xff]
      %v657 = vld [vmem:[%s3 + $0x228] sm:$0xff]
      %v658 = vld [vmem:[%s3 + $0x230] sm:$0xff]
      %v659 = vld [vmem:[%s3 + $0x238] sm:$0xff]
      %v660 = vld [vmem:[%s3 + $0x240] sm:$0xff]
      %v661 = vld [vmem:[%s3 + $0x248] sm:$0xff]
      %v662 = vld [vmem:[%s3 + $0x250] sm:$0xff]
      %v663 = vld [vmem:[%s3 + $0x258] sm:$0xff]
      %v664 = vld [vmem:[%s3 + $0x260] sm:$0xff]
      %v665 = vld [vmem:[%s3 + $0x268] sm:$0xff]
      %v666 = vld [vmem:[%s3 + $0x270] sm:$0xff]
      %v667 = vld [vmem:[%s3 + $0x278] sm:$0xff]
      %v668 = vld [vmem:[%s3 + $0x280] sm:$0xff]
      %v669 = vld [vmem:[%s3 + $0x288] sm:$0xff]
      %v670 = vld [vmem:[%s3 + $0x290] sm:$0xff]
      %v671 = vld [vmem:[%s3 + $0x298] sm:$0xff]
      %v672 = vld [vmem:[%s3 + $0x2a0] sm:$0xff]
      %v673 = vld [vmem:[%s3 + $0x2a8] sm:$0xff]
      %v674 = vld [vmem:[%s3 + $0x2b0] sm:$0xff]
      %v675 = vld [vmem:[%s3 + $0x2b8] sm:$0xff]
      %v676 = vld [vmem:[%s3 + $0x2c0] sm:$0xff]
      %v677 = vld [vmem:[%s3 + $0x2c8] sm:$0xff]
      %v678 = vld [vmem:[%s3 + $0x2d0] sm:$0xff]
      %v679 = vld [vmem:[%s3 + $0x2d8] sm:$0xff]
      %v680 = vld [vmem:[%s3 + $0x2e0] sm:$0xff]
      %v681 = vld [vmem:[%s3 + $0x2e8] sm:$0xff]
      %v682 = vld [vmem:[%s3 + $0x2f0] sm:$0xff]
      %v683 = vld [vmem:[%s3 + $0x2f8] sm:$0xff]
      %v684 = vld [vmem:[%s3 + $0x300] sm:$0xff]
      %v685 = vld [vmem:[%s3 + $0x308] sm:$0xff]
      %v686 = vld [vmem:[%s3 + $0x310] sm:$0xff]
      %v687 = vld [vmem:[%s3 + $0x318] sm:$0xff]
      %v688 = vld [vmem:[%s3 + $0x320] sm:$0xff]
      %v689 = vld [vmem:[%s3 + $0x328] sm:$0xff]
      %v690 = vld [vmem:[%s3 + $0x330] sm:$0xff]
      %v691 = vld [vmem:[%s3 + $0x338] sm:$0xff]
      %v692 = vld [vmem:[%s3 + $0x340] sm:$0xff]
      %v693 = vld [vmem:[%s3 + $0x348] sm:$0xff]
      %v694 = vld [vmem:[%s3 + $0x350] sm:$0xff]
      %v695 = vld [vmem:[%s3 + $0x358] sm:$0xff]
      %v696 = vld [vmem:[%s3 + $0x360] sm:$0xff]
      %v697 = vld [vmem:[%s3 + $0x368] sm:$0xff]
      %v698 = vld [vmem:[%s3 + $0x370] sm:$0xff]
      %v699 = vld [vmem:[%s3 + $0x378] sm:$0xff]
      %v700 = vld [vmem:[%s3 + $0x380] sm:$0xff]
      %v701 = vld [vmem:[%s3 + $0x388] sm:$0xff]
      %v702 = vld [vmem:[%s3 + $0x390] sm:$0xff]
      %v703 = vld [vmem:[%s3 + $0x398] sm:$0xff]
      %v704 = vld [vmem:[%s3 + $0x3a0] sm:$0xff]
      %v705 = vld [vmem:[%s3 + $0x3a8] sm:$0xff]
      %v706 = vld [vmem:[%s3 + $0x3b0] sm:$0xff]
      %v707 = vld [vmem:[%s3 + $0x3b8] sm:$0xff]
      %v708 = vld [vmem:[%s3 + $0x3c0] sm:$0xff]
      %v709 = vld [vmem:[%s3 + $0x3c8] sm:$0xff]
      %v710 = vld [vmem:[%s3 + $0x3d0] sm:$0xff]
      %v711 = vld [vmem:[%s3 + $0x3d8] sm:$0xff]
      %v712 = vld [vmem:[%s3 + $0x3e0] sm:$0xff]
      %v713 = vld [vmem:[%s3 + $0x3e8] sm:$0xff]
      %v714 = vld [vmem:[%s3 + $0x3f0] sm:$0xff]
      %v715 = vld [vmem:[%s3 + $0x3f8] sm:$0xff]
      %v716 = vld [vmem:[%s3 + $0x400] sm:$0xff]
      %v717 = vld [vmem:[%s3 + $0x408] sm:$0xff]
      %v718 = vld [vmem:[%s3 + $0x410] sm:$0xff]
      %v719 = vld [vmem:[%s3 + $0x418] sm:$0xff]
      %v720 = vld [vmem:[%s3 + $0x420] sm:$0xff]
      %v721 = vld [vmem:[%s3 + $0x428] sm:$0xff]
      %v722 = vld [vmem:[%s3 + $0x430] sm:$0xff]
      %v723 = vld [vmem:[%s3 + $0x438] sm:$0xff]
      %v724 = vld [vmem:[%s3 + $0x440] sm:$0xff]
      %v725 = vld [vmem:[%s3 + $0x448] sm:$0xff]
      %v726 = vld [vmem:[%s3 + $0x450] sm:$0xff]
      %v727 = vld [vmem:[%s3 + $0x458] sm:$0xff]
      %v728 = vld [vmem:[%s3 + $0x460] sm:$0xff]
      %v729 = vld [vmem:[%s3 + $0x468] sm:$0xff]
      %v730 = vld [vmem:[%s3 + $0x470] sm:$0xff]
      %v731 = vld [vmem:[%s3 + $0x478] sm:$0xff]
      %v732 = vld [vmem:[%s3 + $0x480] sm:$0xff]
      %v733 = vld [vmem:[%s3 + $0x488] sm:$0xff]
      %v734 = vld [vmem:[%s3 + $0x490] sm:$0xff]
      %v735 = vld [vmem:[%s3 + $0x498] sm:$0xff]
      %v736 = vld [vmem:[%s3 + $0x4a0] sm:$0xff]
      %v737 = vld [vmem:[%s3 + $0x4a8] sm:$0xff]
      %v738 = vld [vmem:[%s3 + $0x4b0] sm:$0xff]
      %v739 = vld [vmem:[%s3 + $0x4b8] sm:$0xff]
      %v740 = vld [vmem:[%s3 + $0x4c0] sm:$0xff]
      %v741 = vld [vmem:[%s3 + $0x4c8] sm:$0xff]
      %v742 = vld [vmem:[%s3 + $0x4d0] sm:$0xff]
      %v743 = vld [vmem:[%s3 + $0x4d8] sm:$0xff]
      %v744 = vld [vmem:[%s3 + $0x4e0] sm:$0xff]
      %v745 = vld [vmem:[%s3 + $0x4e8] sm:$0xff]
      %v746 = vld [vmem:[%s3 + $0x4f0] sm:$0xff]
      %v747 = vld [vmem:[%s3 + $0x4f8] sm:$0xff]
      %v748 = vld [vmem:[%s3 + $0x500] sm:$0xff]
      %v749 = vld [vmem:[%s3 + $0x508] sm:$0xff]
      %v750 = vld [vmem:[%s3 + $0x510] sm:$0xff]
      %v751 = vld [vmem:[%s3 + $0x518] sm:$0xff]
      %v752 = vld [vmem:[%s3 + $0x520] sm:$0xff]
      %v753 = vld [vmem:[%s3 + $0x528] sm:$0xff]
      %v754 = vld [vmem:[%s3 + $0x530] sm:$0xff]
      %v755 = vld [vmem:[%s3 + $0x538] sm:$0xff]
      %v756 = vld [vmem:[%s3 + $0x540] sm:$0xff]
      %v757 = vld [vmem:[%s3 + $0x548] sm:$0xff]
      %v758 = vld [vmem:[%s3 + $0x550] sm:$0xff]
      %v759 = vld [vmem:[%s3 + $0x558] sm:$0xff]
      %v760 = vld [vmem:[%s3 + $0x560] sm:$0xff]
      %v761 = vld [vmem:[%s3 + $0x568] sm:$0xff]
      %v762 = vld [vmem:[%s3 + $0x570] sm:$0xff]
      %v763 = vld [vmem:[%s3 + $0x578] sm:$0xff]
      %v764 = vld [vmem:[%s3 + $0x580] sm:$0xff]
      %v765 = vld [vmem:[%s3 + $0x588] sm:$0xff]
      %v766 = vld [vmem:[%s3 + $0x590] sm:$0xff]
      %v767 = vld [vmem:[%s3 + $0x598] sm:$0xff]
      %v768 = vld [vmem:[%s3 + $0x5a0] sm:$0xff]
      %v769 = vld [vmem:[%s3 + $0x5a8] sm:$0xff]
      %v770 = vld [vmem:[%s3 + $0x5b0] sm:$0xff]
      %v771 = vld [vmem:[%s3 + $0x5b8] sm:$0xff]
      %v772 = vld [vmem:[%s3 + $0x5c0] sm:$0xff]
      %v773 = vld [vmem:[%s3 + $0x5c8] sm:$0xff]
      %v774 = vld [vmem:[%s3 + $0x5d0] sm:$0xff]
      %v775 = vld [vmem:[%s3 + $0x5d8] sm:$0xff]
      %v776 = vld [vmem:[%s3 + $0x5e0] sm:$0xff]
      %v777 = vld [vmem:[%s3 + $0x5e8] sm:$0xff]
      %v778 = vld [vmem:[%s3 + $0x5f0] sm:$0xff]
      %v779 = vld [vmem:[%s3 + $0x5f8] sm:$0xff]
      %v780 = vld [vmem:[%s3 + $0x600] sm:$0xff]
      %v781 = vld [vmem:[%s3 + $0x608] sm:$0xff]
      %v782 = vld [vmem:[%s3 + $0x610] sm:$0xff]
      %v783 = vld [vmem:[%s3 + $0x618] sm:$0xff]
      %v784 = vld [vmem:[%s3 + $0x620] sm:$0xff]
      %v785 = vld [vmem:[%s3 + $0x628] sm:$0xff]
      %v786 = vld [vmem:[%s3 + $0x630] sm:$0xff]
      %v787 = vld [vmem:[%s3 + $0x638] sm:$0xff]
      %v788 = vld [vmem:[%s3 + $0x640] sm:$0xff]
      %v789 = vld [vmem:[%s3 + $0x648] sm:$0xff]
      %v790 = vld [vmem:[%s3 + $0x650] sm:$0xff]
      %v791 = vld [vmem:[%s3 + $0x658] sm:$0xff]
      %v792 = vld [vmem:[%s3 + $0x660] sm:$0xff]
      %v793 = vld [vmem:[%s3 + $0x668] sm:$0xff]
      %v794 = vld [vmem:[%s3 + $0x670] sm:$0xff]
      %v795 = vld [vmem:[%s3 + $0x678] sm:$0xff]
      %v796 = vld [vmem:[%s3 + $0x680] sm:$0xff]
      %v797 = vld [vmem:[%s3 + $0x688] sm:$0xff]
      %v798 = vld [vmem:[%s3 + $0x690] sm:$0xff]
      %v799 = vld [vmem:[%s3 + $0x698] sm:$0xff]
      %v800 = vld [vmem:[%s3 + $0x6a0] sm:$0xff]
      %v801 = vld [vmem:[%s3 + $0x6a8] sm:$0xff]
      %v802 = vld [vmem:[%s3 + $0x6b0] sm:$0xff]
      %v803 = vld [vmem:[%s3 + $0x6b8] sm:$0xff]
      %v804 = vld [vmem:[%s3 + $0x6c0] sm:$0xff]
      %v805 = vld [vmem:[%s3 + $0x6c8] sm:$0xff]
      %v806 = vld [vmem:[%s3 + $0x6d0] sm:$0xff]
      %v807 = vld [vmem:[%s3 + $0x6d8] sm:$0xff]
      %v808 = vld [vmem:[%s3 + $0x6e0] sm:$0xff]
      %v809 = vld [vmem:[%s3 + $0x6e8] sm:$0xff]
      %v810 = vld [vmem:[%s3 + $0x6f0] sm:$0xff]
      %v811 = vld [vmem:[%s3 + $0x6f8] sm:$0xff]
      %v812 = vld [vmem:[%s3 + $0x700] sm:$0xff]
      %v813 = vld [vmem:[%s3 + $0x708] sm:$0xff]
      %v814 = vld [vmem:[%s3 + $0x710] sm:$0xff]
      %v815 = vld [vmem:[%s3 + $0x718] sm:$0xff]
      %v816 = vld [vmem:[%s3 + $0x720] sm:$0xff]
      %v817 = vld [vmem:[%s3 + $0x728] sm:$0xff]
      %v818 = vld [vmem:[%s3 + $0x730] sm:$0xff]
      %v819 = vld [vmem:[%s3 + $0x738] sm:$0xff]
      %v820 = vld [vmem:[%s3 + $0x740] sm:$0xff]
      %v821 = vld [vmem:[%s3 + $0x748] sm:$0xff]
      %v822 = vld [vmem:[%s3 + $0x750] sm:$0xff]
      %v823 = vld [vmem:[%s3 + $0x758] sm:$0xff]
      %v824 = vld [vmem:[%s3 + $0x760] sm:$0xff]
      %v825 = vld [vmem:[%s3 + $0x768] sm:$0xff]
      %v826 = vld [vmem:[%s3 + $0x770] sm:$0xff]
      %v827 = vld [vmem:[%s3 + $0x778] sm:$0xff]
      %v828 = vmul.f32 %v588, %v564
      %v829 = vmul.f32 %v589, %v565
      %v830 = vmul.f32 %v590, %v566
      %v831 = vmul.f32 %v591, %v567
      %v832 = vmul.f32 %v592, %v568
      %v833 = vmul.f32 %v593, %v569
      %v834 = vmul.f32 %v594, %v570
      %v835 = vmul.f32 %v595, %v571
      %v836 = vmul.f32 %v596, %v572
      %v837 = vmul.f32 %v597, %v573
      %v838 = vmul.f32 %v598, %v574
      %v839 = vmul.f32 %v599, %v575
      %v840 = vmul.f32 %v600, %v576
      %v841 = vmul.f32 %v601, %v577
      %v842 = vmul.f32 %v602, %v578
      %v843 = vmul.f32 %v603, %v579
      %v844 = vmul.f32 %v604, %v580
      %v845 = vmul.f32 %v605, %v581
      %v846 = vmul.f32 %v606, %v582
      %v847 = vmul.f32 %v607, %v583
      %v848 = vmul.f32 %v608, %v584
      %v849 = vmul.f32 %v609, %v585
      %v850 = vmul.f32 %v610, %v586
      %v851 = vmul.f32 %v611, %v587
      %v852 = vmul.f32 %v612, %v564
      %v853 = vmul.f32 %v613, %v565
      %v854 = vmul.f32 %v614, %v566
      %v855 = vmul.f32 %v615, %v567
      %v856 = vmul.f32 %v616, %v568
      %v857 = vmul.f32 %v617, %v569
      %v858 = vmul.f32 %v618, %v570
      %v859 = vmul.f32 %v619, %v571
      %v860 = vmul.f32 %v620, %v572
      %v861 = vmul.f32 %v621, %v573
      %v862 = vmul.f32 %v622, %v574
      %v863 = vmul.f32 %v623, %v575
      %v864 = vmul.f32 %v624, %v576
      %v865 = vmul.f32 %v625, %v577
      %v866 = vmul.f32 %v626, %v578
      %v867 = vmul.f32 %v627, %v579
      %v868 = vmul.f32 %v628, %v580
      %v869 = vmul.f32 %v629, %v581
      %v870 = vmul.f32 %v630, %v582
      %v871 = vmul.f32 %v631, %v583
      %v872 = vmul.f32 %v632, %v584
      %v873 = vmul.f32 %v633, %v585
      %v874 = vmul.f32 %v634, %v586
      %v875 = vmul.f32 %v635, %v587
      %v876 = vmul.f32 %v636, %v564
      %v877 = vmul.f32 %v637, %v565
      %v878 = vmul.f32 %v638, %v566
      %v879 = vmul.f32 %v639, %v567
      %v880 = vmul.f32 %v640, %v568
      %v881 = vmul.f32 %v641, %v569
      %v882 = vmul.f32 %v642, %v570
      %v883 = vmul.f32 %v643, %v571
      %v884 = vmul.f32 %v644, %v572
      %v885 = vmul.f32 %v645, %v573
      %v886 = vmul.f32 %v646, %v574
      %v887 = vmul.f32 %v647, %v575
      %v888 = vmul.f32 %v648, %v576
      %v889 = vmul.f32 %v649, %v577
      %v890 = vmul.f32 %v650, %v578
      %v891 = vmul.f32 %v651, %v579
      %v892 = vmul.f32 %v652, %v580
      %v893 = vmul.f32 %v653, %v581
      %v894 = vmul.f32 %v654, %v582
      %v895 = vmul.f32 %v655, %v583
      %v896 = vmul.f32 %v656, %v584
      %v897 = vmul.f32 %v657, %v585
      %v898 = vmul.f32 %v658, %v586
      %v899 = vmul.f32 %v659, %v587
      %v900 = vmul.f32 %v660, %v564
      %v901 = vmul.f32 %v661, %v565
      %v902 = vmul.f32 %v662, %v566
      %v903 = vmul.f32 %v663, %v567
      %v904 = vmul.f32 %v664, %v568
      %v905 = vmul.f32 %v665, %v569
      %v906 = vmul.f32 %v666, %v570
      %v907 = vmul.f32 %v667, %v571
      %v908 = vmul.f32 %v668, %v572
      %v909 = vmul.f32 %v669, %v573
      %v910 = vmul.f32 %v670, %v574
      %v911 = vmul.f32 %v671, %v575
      %v912 = vmul.f32 %v672, %v576
      %v913 = vmul.f32 %v673, %v577
      %v914 = vmul.f32 %v674, %v578
      %v915 = vmul.f32 %v675, %v579
      %v916 = vmul.f32 %v676, %v580
      %v917 = vmul.f32 %v677, %v581
      %v918 = vmul.f32 %v678, %v582
      %v919 = vmul.f32 %v679, %v583
      %v920 = vmul.f32 %v680, %v584
      %v921 = vmul.f32 %v681, %v585
      %v922 = vmul.f32 %v682, %v586
      %v923 = vmul.f32 %v683, %v587
      %v924 = vmul.f32 %v684, %v564
      %v925 = vmul.f32 %v685, %v565
      %v926 = vmul.f32 %v686, %v566
      %v927 = vmul.f32 %v687, %v567
      %v928 = vmul.f32 %v688, %v568
      %v929 = vmul.f32 %v689, %v569
      %v930 = vmul.f32 %v690, %v570
      %v931 = vmul.f32 %v691, %v571
      %v932 = vmul.f32 %v692, %v572
      %v933 = vmul.f32 %v693, %v573
      %v934 = vmul.f32 %v694, %v574
      %v935 = vmul.f32 %v695, %v575
      %v936 = vmul.f32 %v696, %v576
      %v937 = vmul.f32 %v697, %v577
      %v938 = vmul.f32 %v698, %v578
      %v939 = vmul.f32 %v699, %v579
      %v940 = vmul.f32 %v700, %v580
      %v941 = vmul.f32 %v701, %v581
      %v942 = vmul.f32 %v702, %v582
      %v943 = vmul.f32 %v703, %v583
      %v944 = vmul.f32 %v704, %v584
      %v945 = vmul.f32 %v705, %v585
      %v946 = vmul.f32 %v706, %v586
      %v947 = vmul.f32 %v707, %v587
      %v948 = vmul.f32 %v708, %v564
      %v949 = vmul.f32 %v709, %v565
      %v950 = vmul.f32 %v710, %v566
      %v951 = vmul.f32 %v711, %v567
      %v952 = vmul.f32 %v712, %v568
      %v953 = vmul.f32 %v713, %v569
      %v954 = vmul.f32 %v714, %v570
      %v955 = vmul.f32 %v715, %v571
      %v956 = vmul.f32 %v716, %v572
      %v957 = vmul.f32 %v717, %v573
      %v958 = vmul.f32 %v718, %v574
      %v959 = vmul.f32 %v719, %v575
      %v960 = vmul.f32 %v720, %v576
      %v961 = vmul.f32 %v721, %v577
      %v962 = vmul.f32 %v722, %v578
      %v963 = vmul.f32 %v723, %v579
      %v964 = vmul.f32 %v724, %v580
      %v965 = vmul.f32 %v725, %v581
      %v966 = vmul.f32 %v726, %v582
      %v967 = vmul.f32 %v727, %v583
      %v968 = vmul.f32 %v728, %v584
      %v969 = vmul.f32 %v729, %v585
      %v970 = vmul.f32 %v730, %v586
      %v971 = vmul.f32 %v731, %v587
      %v972 = vmul.f32 %v732, %v564
      %v973 = vmul.f32 %v733, %v565
      %v974 = vmul.f32 %v734, %v566
      %v975 = vmul.f32 %v735, %v567
      %v976 = vmul.f32 %v736, %v568
      %v977 = vmul.f32 %v737, %v569
      %v978 = vmul.f32 %v738, %v570
      %v979 = vmul.f32 %v739, %v571
      %v980 = vmul.f32 %v740, %v572
      %v981 = vmul.f32 %v741, %v573
      %v982 = vmul.f32 %v742, %v574
      %v983 = vmul.f32 %v743, %v575
      %v984 = vmul.f32 %v744, %v576
      %v985 = vmul.f32 %v745, %v577
      %v986 = vmul.f32 %v746, %v578
      %v987 = vmul.f32 %v747, %v579
      %v988 = vmul.f32 %v748, %v580
      %v989 = vmul.f32 %v749, %v581
      %v990 = vmul.f32 %v750, %v582
      %v991 = vmul.f32 %v751, %v583
      %v992 = vmul.f32 %v752, %v584
      %v993 = vmul.f32 %v753, %v585
      %v994 = vmul.f32 %v754, %v586
      %v995 = vmul.f32 %v755, %v587
      %v996 = vmul.f32 %v756, %v564
      %v997 = vmul.f32 %v757, %v565
      %v998 = vmul.f32 %v758, %v566
      %v999 = vmul.f32 %v759, %v567
      %v1000 = vmul.f32 %v760, %v568
      %v1001 = vmul.f32 %v761, %v569
      %v1002 = vmul.f32 %v762, %v570
      %v1003 = vmul.f32 %v763, %v571
      %v1004 = vmul.f32 %v764, %v572
      %v1005 = vmul.f32 %v765, %v573
      %v1006 = vmul.f32 %v766, %v574
      %v1007 = vmul.f32 %v767, %v575
      %v1008 = vmul.f32 %v768, %v576
      %v1009 = vmul.f32 %v769, %v577
      %v1010 = vmul.f32 %v770, %v578
      %v1011 = vmul.f32 %v771, %v579
      %v1012 = vmul.f32 %v772, %v580
      %v1013 = vmul.f32 %v773, %v581
      %v1014 = vmul.f32 %v774, %v582
      %v1015 = vmul.f32 %v775, %v583
      %v1016 = vmul.f32 %v776, %v584
      %v1017 = vmul.f32 %v777, %v585
      %v1018 = vmul.f32 %v778, %v586
      %v1019 = vmul.f32 %v779, %v587
      %v1020 = vmul.f32 %v780, %v564
      %v1021 = vmul.f32 %v781, %v565
      %v1022 = vmul.f32 %v782, %v566
      %v1023 = vmul.f32 %v783, %v567
      %v1024 = vmul.f32 %v784, %v568
      %v1025 = vmul.f32 %v785, %v569
      %v1026 = vmul.f32 %v786, %v570
      %v1027 = vmul.f32 %v787, %v571
      %v1028 = vmul.f32 %v788, %v572
      %v1029 = vmul.f32 %v789, %v573
      %v1030 = vmul.f32 %v790, %v574
      %v1031 = vmul.f32 %v791, %v575
      %v1032 = vmul.f32 %v792, %v576
      %v1033 = vmul.f32 %v793, %v577
      %v1034 = vmul.f32 %v794, %v578
      %v1035 = vmul.f32 %v795, %v579
      %v1036 = vmul.f32 %v796, %v580
      %v1037 = vmul.f32 %v797, %v581
      %v1038 = vmul.f32 %v798, %v582
      %v1039 = vmul.f32 %v799, %v583
      %v1040 = vmul.f32 %v800, %v584
      %v1041 = vmul.f32 %v801, %v585
      %v1042 = vmul.f32 %v802, %v586
      %v1043 = vmul.f32 %v803, %v587
      %v1044 = vmul.f32 %v804, %v564
      %v1045 = vmul.f32 %v805, %v565
      %v1046 = vmul.f32 %v806, %v566
      %v1047 = vmul.f32 %v807, %v567
      %v1048 = vmul.f32 %v808, %v568
      %v1049 = vmul.f32 %v809, %v569
      %v1050 = vmul.f32 %v810, %v570
      %v1051 = vmul.f32 %v811, %v571
      %v1052 = vmul.f32 %v812, %v572
      %v1053 = vmul.f32 %v813, %v573
      %v1054 = vmul.f32 %v814, %v574
      %v1055 = vmul.f32 %v815, %v575
      %v1056 = vmul.f32 %v816, %v576
      %v1057 = vmul.f32 %v817, %v577
      %v1058 = vmul.f32 %v818, %v578
      %v1059 = vmul.f32 %v819, %v579
      %v1060 = vmul.f32 %v820, %v580
      %v1061 = vmul.f32 %v821, %v581
      %v1062 = vmul.f32 %v822, %v582
      %v1063 = vmul.f32 %v823, %v583
      %v1064 = vmul.f32 %v824, %v584
      %v1065 = vmul.f32 %v825, %v585
      %v1066 = vmul.f32 %v826, %v586
      %v1067 = vmul.f32 %v827, %v587
      %v1068 = vadd.f32 %v828, %v829
      %v1069 = vadd.f32 %v1068, %v830
      %v1070 = vadd.f32 %v1069, %v831
      %v1071 = vadd.f32 %v1070, %v832
      %vm1072 = vcmask 293888
      %v1073 = vsel %vm1072, %v833, 0.0
      %v1074 = vadd.f32 %v1071, %v1073
      %1075 = vadd.xlane.f32.xlu0 %v1074
      %v1076 = vpop.xlane.xlu0 %1075
      %v1077 = vadd.f32 %v834, %v835
      %v1078 = vadd.f32 %v1077, %v836
      %v1079 = vadd.f32 %v1078, %v837
      %v1080 = vadd.f32 %v1079, %v838
      %v1081 = vsel %vm1072, %v839, 0.0
      %v1082 = vadd.f32 %v1080, %v1081
      %1083 = vadd.xlane.f32.xlu0 %v1082
      %v1084 = vpop.xlane.xlu0 %1083
      %v1085 = vadd.f32 %v840, %v841
      %v1086 = vadd.f32 %v1085, %v842
      %v1087 = vadd.f32 %v1086, %v843
      %v1088 = vadd.f32 %v1087, %v844
      %v1089 = vsel %vm1072, %v845, 0.0
      %v1090 = vadd.f32 %v1088, %v1089
      %1091 = vadd.xlane.f32.xlu0 %v1090
      %v1092 = vpop.xlane.xlu0 %1091
      %v1093 = vadd.f32 %v846, %v847
      %v1094 = vadd.f32 %v1093, %v848
      %v1095 = vadd.f32 %v1094, %v849
      %v1096 = vadd.f32 %v1095, %v850
      %v1097 = vsel %vm1072, %v851, 0.0
      %v1098 = vadd.f32 %v1096, %v1097
      %1099 = vadd.xlane.f32.xlu0 %v1098
      %v1100 = vpop.xlane.xlu0 %1099
      %v1101 = vadd.f32 %v852, %v853
      %v1102 = vadd.f32 %v1101, %v854
      %v1103 = vadd.f32 %v1102, %v855
      %v1104 = vadd.f32 %v1103, %v856
      %v1105 = vsel %vm1072, %v857, 0.0
      %v1106 = vadd.f32 %v1104, %v1105
      %1107 = vadd.xlane.f32.xlu0 %v1106
      %v1108 = vpop.xlane.xlu0 %1107
      %v1109 = vadd.f32 %v858, %v859
      %v1110 = vadd.f32 %v1109, %v860
      %v1111 = vadd.f32 %v1110, %v861
      %v1112 = vadd.f32 %v1111, %v862
      %v1113 = vsel %vm1072, %v863, 0.0
      %v1114 = vadd.f32 %v1112, %v1113
      %1115 = vadd.xlane.f32.xlu0 %v1114
      %v1116 = vpop.xlane.xlu0 %1115
      %v1117 = vadd.f32 %v864, %v865
      %v1118 = vadd.f32 %v1117, %v866
      %v1119 = vadd.f32 %v1118, %v867
      %v1120 = vadd.f32 %v1119, %v868
      %v1121 = vsel %vm1072, %v869, 0.0
      %v1122 = vadd.f32 %v1120, %v1121
      %1123 = vadd.xlane.f32.xlu0 %v1122
      %v1124 = vpop.xlane.xlu0 %1123
      %v1125 = vadd.f32 %v870, %v871
      %v1126 = vadd.f32 %v1125, %v872
      %v1127 = vadd.f32 %v1126, %v873
      %v1128 = vadd.f32 %v1127, %v874
      %v1129 = vsel %vm1072, %v875, 0.0
      %v1130 = vadd.f32 %v1128, %v1129
      %1131 = vadd.xlane.f32.xlu0 %v1130
      %v1132 = vpop.xlane.xlu0 %1131
      %v1133 = vadd.f32 %v876, %v877
      %v1134 = vadd.f32 %v1133, %v878
      %v1135 = vadd.f32 %v1134, %v879
      %v1136 = vadd.f32 %v1135, %v880
      %v1137 = vsel %vm1072, %v881, 0.0
      %v1138 = vadd.f32 %v1136, %v1137
      %1139 = vadd.xlane.f32.xlu0 %v1138
      %v1140 = vpop.xlane.xlu0 %1139
      %v1141 = vadd.f32 %v882, %v883
      %v1142 = vadd.f32 %v1141, %v884
      %v1143 = vadd.f32 %v1142, %v885
      %v1144 = vadd.f32 %v1143, %v886
      %v1145 = vsel %vm1072, %v887, 0.0
      %v1146 = vadd.f32 %v1144, %v1145
      %1147 = vadd.xlane.f32.xlu0 %v1146
      %v1148 = vpop.xlane.xlu0 %1147
      %v1149 = vadd.f32 %v888, %v889
      %v1150 = vadd.f32 %v1149, %v890
      %v1151 = vadd.f32 %v1150, %v891
      %v1152 = vadd.f32 %v1151, %v892
      %v1153 = vsel %vm1072, %v893, 0.0
      %v1154 = vadd.f32 %v1152, %v1153
      %1155 = vadd.xlane.f32.xlu0 %v1154
      %v1156 = vpop.xlane.xlu0 %1155
      %v1157 = vadd.f32 %v894, %v895
      %v1158 = vadd.f32 %v1157, %v896
      %v1159 = vadd.f32 %v1158, %v897
      %v1160 = vadd.f32 %v1159, %v898
      %v1161 = vsel %vm1072, %v899, 0.0
      %v1162 = vadd.f32 %v1160, %v1161
      %1163 = vadd.xlane.f32.xlu0 %v1162
      %v1164 = vpop.xlane.xlu0 %1163
      %v1165 = vadd.f32 %v900, %v901
      %v1166 = vadd.f32 %v1165, %v902
      %v1167 = vadd.f32 %v1166, %v903
      %v1168 = vadd.f32 %v1167, %v904
      %v1169 = vsel %vm1072, %v905, 0.0
      %v1170 = vadd.f32 %v1168, %v1169
      %1171 = vadd.xlane.f32.xlu0 %v1170
      %v1172 = vpop.xlane.xlu0 %1171
      %v1173 = vadd.f32 %v906, %v907
      %v1174 = vadd.f32 %v1173, %v908
      %v1175 = vadd.f32 %v1174, %v909
      %v1176 = vadd.f32 %v1175, %v910
      %v1177 = vsel %vm1072, %v911, 0.0
      %v1178 = vadd.f32 %v1176, %v1177
      %1179 = vadd.xlane.f32.xlu0 %v1178
      %v1180 = vpop.xlane.xlu0 %1179
      %v1181 = vadd.f32 %v912, %v913
      %v1182 = vadd.f32 %v1181, %v914
      %v1183 = vadd.f32 %v1182, %v915
      %v1184 = vadd.f32 %v1183, %v916
      %v1185 = vsel %vm1072, %v917, 0.0
      %v1186 = vadd.f32 %v1184, %v1185
      %1187 = vadd.xlane.f32.xlu0 %v1186
      %v1188 = vpop.xlane.xlu0 %1187
      %v1189 = vadd.f32 %v918, %v919
      %v1190 = vadd.f32 %v1189, %v920
      %v1191 = vadd.f32 %v1190, %v921
      %v1192 = vadd.f32 %v1191, %v922
      %v1193 = vsel %vm1072, %v923, 0.0
      %v1194 = vadd.f32 %v1192, %v1193
      %1195 = vadd.xlane.f32.xlu0 %v1194
      %v1196 = vpop.xlane.xlu0 %1195
      %v1197 = vadd.f32 %v924, %v925
      %v1198 = vadd.f32 %v1197, %v926
      %v1199 = vadd.f32 %v1198, %v927
      %v1200 = vadd.f32 %v1199, %v928
      %v1201 = vsel %vm1072, %v929, 0.0
      %v1202 = vadd.f32 %v1200, %v1201
      %1203 = vadd.xlane.f32.xlu0 %v1202
      %v1204 = vpop.xlane.xlu0 %1203
      %v1205 = vadd.f32 %v930, %v931
      %v1206 = vadd.f32 %v1205, %v932
      %v1207 = vadd.f32 %v1206, %v933
      %v1208 = vadd.f32 %v1207, %v934
      %v1209 = vsel %vm1072, %v935, 0.0
      %v1210 = vadd.f32 %v1208, %v1209
      %1211 = vadd.xlane.f32.xlu0 %v1210
      %v1212 = vpop.xlane.xlu0 %1211
      %v1213 = vadd.f32 %v936, %v937
      %v1214 = vadd.f32 %v1213, %v938
      %v1215 = vadd.f32 %v1214, %v939
      %v1216 = vadd.f32 %v1215, %v940
      %v1217 = vsel %vm1072, %v941, 0.0
      %v1218 = vadd.f32 %v1216, %v1217
      %1219 = vadd.xlane.f32.xlu0 %v1218
      %v1220 = vpop.xlane.xlu0 %1219
      %v1221 = vadd.f32 %v942, %v943
      %v1222 = vadd.f32 %v1221, %v944
      %v1223 = vadd.f32 %v1222, %v945
      %v1224 = vadd.f32 %v1223, %v946
      %v1225 = vsel %vm1072, %v947, 0.0
      %v1226 = vadd.f32 %v1224, %v1225
      %1227 = vadd.xlane.f32.xlu0 %v1226
      %v1228 = vpop.xlane.xlu0 %1227
      %v1229 = vadd.f32 %v948, %v949
      %v1230 = vadd.f32 %v1229, %v950
      %v1231 = vadd.f32 %v1230, %v951
      %v1232 = vadd.f32 %v1231, %v952
      %v1233 = vsel %vm1072, %v953, 0.0
      %v1234 = vadd.f32 %v1232, %v1233
      %1235 = vadd.xlane.f32.xlu0 %v1234
      %v1236 = vpop.xlane.xlu0 %1235
      %v1237 = vadd.f32 %v954, %v955
      %v1238 = vadd.f32 %v1237, %v956
      %v1239 = vadd.f32 %v1238, %v957
      %v1240 = vadd.f32 %v1239, %v958
      %v1241 = vsel %vm1072, %v959, 0.0
      %v1242 = vadd.f32 %v1240, %v1241
      %1243 = vadd.xlane.f32.xlu0 %v1242
      %v1244 = vpop.xlane.xlu0 %1243
      %v1245 = vadd.f32 %v960, %v961
      %v1246 = vadd.f32 %v1245, %v962
      %v1247 = vadd.f32 %v1246, %v963
      %v1248 = vadd.f32 %v1247, %v964
      %v1249 = vsel %vm1072, %v965, 0.0
      %v1250 = vadd.f32 %v1248, %v1249
      %1251 = vadd.xlane.f32.xlu0 %v1250
      %v1252 = vpop.xlane.xlu0 %1251
      %v1253 = vadd.f32 %v966, %v967
      %v1254 = vadd.f32 %v1253, %v968
      %v1255 = vadd.f32 %v1254, %v969
      %v1256 = vadd.f32 %v1255, %v970
      %v1257 = vsel %vm1072, %v971, 0.0
      %v1258 = vadd.f32 %v1256, %v1257
      %1259 = vadd.xlane.f32.xlu0 %v1258
      %v1260 = vpop.xlane.xlu0 %1259
      %v1261 = vadd.f32 %v972, %v973
      %v1262 = vadd.f32 %v1261, %v974
      %v1263 = vadd.f32 %v1262, %v975
      %v1264 = vadd.f32 %v1263, %v976
      %v1265 = vsel %vm1072, %v977, 0.0
      %v1266 = vadd.f32 %v1264, %v1265
      %1267 = vadd.xlane.f32.xlu0 %v1266
      %v1268 = vpop.xlane.xlu0 %1267
      %v1269 = vadd.f32 %v978, %v979
      %v1270 = vadd.f32 %v1269, %v980
      %v1271 = vadd.f32 %v1270, %v981
      %v1272 = vadd.f32 %v1271, %v982
      %v1273 = vsel %vm1072, %v983, 0.0
      %v1274 = vadd.f32 %v1272, %v1273
      %1275 = vadd.xlane.f32.xlu0 %v1274
      %v1276 = vpop.xlane.xlu0 %1275
      %v1277 = vadd.f32 %v984, %v985
      %v1278 = vadd.f32 %v1277, %v986
      %v1279 = vadd.f32 %v1278, %v987
      %v1280 = vadd.f32 %v1279, %v988
      %v1281 = vsel %vm1072, %v989, 0.0
      %v1282 = vadd.f32 %v1280, %v1281
      %1283 = vadd.xlane.f32.xlu0 %v1282
      %v1284 = vpop.xlane.xlu0 %1283
      %v1285 = vadd.f32 %v990, %v991
      %v1286 = vadd.f32 %v1285, %v992
      %v1287 = vadd.f32 %v1286, %v993
      %v1288 = vadd.f32 %v1287, %v994
      %v1289 = vsel %vm1072, %v995, 0.0
      %v1290 = vadd.f32 %v1288, %v1289
      %1291 = vadd.xlane.f32.xlu0 %v1290
      %v1292 = vpop.xlane.xlu0 %1291
      %v1293 = vadd.f32 %v996, %v997
      %v1294 = vadd.f32 %v1293, %v998
      %v1295 = vadd.f32 %v1294, %v999
      %v1296 = vadd.f32 %v1295, %v1000
      %v1297 = vsel %vm1072, %v1001, 0.0
      %v1298 = vadd.f32 %v1296, %v1297
      %1299 = vadd.xlane.f32.xlu0 %v1298
      %v1300 = vpop.xlane.xlu0 %1299
      %v1301 = vadd.f32 %v1002, %v1003
      %v1302 = vadd.f32 %v1301, %v1004
      %v1303 = vadd.f32 %v1302, %v1005
      %v1304 = vadd.f32 %v1303, %v1006
      %v1305 = vsel %vm1072, %v1007, 0.0
      %v1306 = vadd.f32 %v1304, %v1305
      %1307 = vadd.xlane.f32.xlu0 %v1306
      %v1308 = vpop.xlane.xlu0 %1307
      %v1309 = vadd.f32 %v1008, %v1009
      %v1310 = vadd.f32 %v1309, %v1010
      %v1311 = vadd.f32 %v1310, %v1011
      %v1312 = vadd.f32 %v1311, %v1012
      %v1313 = vsel %vm1072, %v1013, 0.0
      %v1314 = vadd.f32 %v1312, %v1313
      %1315 = vadd.xlane.f32.xlu0 %v1314
      %v1316 = vpop.xlane.xlu0 %1315
      %v1317 = vadd.f32 %v1014, %v1015
      %v1318 = vadd.f32 %v1317, %v1016
      %v1319 = vadd.f32 %v1318, %v1017
      %v1320 = vadd.f32 %v1319, %v1018
      %v1321 = vsel %vm1072, %v1019, 0.0
      %v1322 = vadd.f32 %v1320, %v1321
      %1323 = vadd.xlane.f32.xlu0 %v1322
      %v1324 = vpop.xlane.xlu0 %1323
      %v1325 = vadd.f32 %v1020, %v1021
      %v1326 = vadd.f32 %v1325, %v1022
      %v1327 = vadd.f32 %v1326, %v1023
      %v1328 = vadd.f32 %v1327, %v1024
      %v1329 = vsel %vm1072, %v1025, 0.0
      %v1330 = vadd.f32 %v1328, %v1329
      %1331 = vadd.xlane.f32.xlu0 %v1330
      %v1332 = vpop.xlane.xlu0 %1331
      %v1333 = vadd.f32 %v1026, %v1027
      %v1334 = vadd.f32 %v1333, %v1028
      %v1335 = vadd.f32 %v1334, %v1029
      %v1336 = vadd.f32 %v1335, %v1030
      %v1337 = vsel %vm1072, %v1031, 0.0
      %v1338 = vadd.f32 %v1336, %v1337
      %1339 = vadd.xlane.f32.xlu0 %v1338
      %v1340 = vpop.xlane.xlu0 %1339
      %v1341 = vadd.f32 %v1032, %v1033
      %v1342 = vadd.f32 %v1341, %v1034
      %v1343 = vadd.f32 %v1342, %v1035
      %v1344 = vadd.f32 %v1343, %v1036
      %v1345 = vsel %vm1072, %v1037, 0.0
      %v1346 = vadd.f32 %v1344, %v1345
      %1347 = vadd.xlane.f32.xlu0 %v1346
      %v1348 = vpop.xlane.xlu0 %1347
      %v1349 = vadd.f32 %v1038, %v1039
      %v1350 = vadd.f32 %v1349, %v1040
      %v1351 = vadd.f32 %v1350, %v1041
      %v1352 = vadd.f32 %v1351, %v1042
      %v1353 = vsel %vm1072, %v1043, 0.0
      %v1354 = vadd.f32 %v1352, %v1353
      %1355 = vadd.xlane.f32.xlu0 %v1354
      %v1356 = vpop.xlane.xlu0 %1355
      %v1357 = vadd.f32 %v1044, %v1045
      %v1358 = vadd.f32 %v1357, %v1046
      %v1359 = vadd.f32 %v1358, %v1047
      %v1360 = vadd.f32 %v1359, %v1048
      %v1361 = vsel %vm1072, %v1049, 0.0
      %v1362 = vadd.f32 %v1360, %v1361
      %1363 = vadd.xlane.f32.xlu0 %v1362
      %v1364 = vpop.xlane.xlu0 %1363
      %v1365 = vadd.f32 %v1050, %v1051
      %v1366 = vadd.f32 %v1365, %v1052
      %v1367 = vadd.f32 %v1366, %v1053
      %v1368 = vadd.f32 %v1367, %v1054
      %v1369 = vsel %vm1072, %v1055, 0.0
      %v1370 = vadd.f32 %v1368, %v1369
      %1371 = vadd.xlane.f32.xlu0 %v1370
      %v1372 = vpop.xlane.xlu0 %1371
      %v1373 = vadd.f32 %v1056, %v1057
      %v1374 = vadd.f32 %v1373, %v1058
      %v1375 = vadd.f32 %v1374, %v1059
      %v1376 = vadd.f32 %v1375, %v1060
      %v1377 = vsel %vm1072, %v1061, 0.0
      %v1378 = vadd.f32 %v1376, %v1377
      %1379 = vadd.xlane.f32.xlu0 %v1378
      %v1380 = vpop.xlane.xlu0 %1379
      %v1381 = vadd.f32 %v1062, %v1063
      %v1382 = vadd.f32 %v1381, %v1064
      %v1383 = vadd.f32 %v1382, %v1065
      %v1384 = vadd.f32 %v1383, %v1066
      %v1385 = vsel %vm1072, %v1067, 0.0
      %v1386 = vadd.f32 %v1384, %v1385
      %1387 = vadd.xlane.f32.xlu0 %v1386
      %v1388 = vpop.xlane.xlu0 %1387
      %v1429 = vlaneseq
      %v1430 = vand.u32 %v1429, 127
      %v1431 = vlaneseq
      %v1432 = vshrl.u32 %v1431, 7
      %v1433 = vsub.s32 %v1430, %v1432
      %v1434 = vrot.slane %v1076, %v1433
      %v1435 = vadd.s32 %v1430, 4294967288
      %v1436 = vlaneseq
      %v1437 = vshrl.u32 %v1436, 7
      %v1438 = vsub.s32 %v1435, %v1437
      %v1439 = vrot.slane %v1084, %v1438
      %vm1440 = vcmask 130112
      %v1441 = vsel %vm1440, %v1439, %v1434
      %v1442 = vadd.s32 %v1430, 4294967280
      %v1443 = vlaneseq
      %v1444 = vshrl.u32 %v1443, 7
      %v1445 = vsub.s32 %v1442, %v1444
      %v1446 = vrot.slane %v1092, %v1445
      %vm1447 = vcmask 195712
      %v1448 = vsel %vm1447, %v1446, %v1441
      %v1449 = vadd.s32 %v1430, 4294967272
      %v1450 = vlaneseq
      %v1451 = vshrl.u32 %v1450, 7
      %v1452 = vsub.s32 %v1449, %v1451
      %v1453 = vrot.slane %v1100, %v1452
      %vm1454 = vcmask 261312
      %v1455 = vsel %vm1454, %v1453, %v1448
      %v1456 = vlaneseq
      %v1457 = vshrl.u32 %v1456, 7
      %v1458 = vsub.s32 %v1430, %v1457
      %v1459 = vrot.slane %v1108, %v1458
      %v1460 = vlaneseq
      %v1461 = vshrl.u32 %v1460, 7
      %v1462 = vsub.s32 %v1435, %v1461
      %v1463 = vrot.slane %v1116, %v1462
      %v1464 = vsel %vm1440, %v1463, %v1459
      %v1465 = vlaneseq
      %v1466 = vshrl.u32 %v1465, 7
      %v1467 = vsub.s32 %v1442, %v1466
      %v1468 = vrot.slane %v1124, %v1467
      %v1469 = vsel %vm1447, %v1468, %v1464
      %v1470 = vlaneseq
      %v1471 = vshrl.u32 %v1470, 7
      %v1472 = vsub.s32 %v1449, %v1471
      %v1473 = vrot.slane %v1132, %v1472
      %v1474 = vsel %vm1454, %v1473, %v1469
      %v1475 = vlaneseq
      %v1476 = vshrl.u32 %v1475, 7
      %v1477 = vsub.s32 %v1430, %v1476
      %v1478 = vrot.slane %v1140, %v1477
      %v1479 = vlaneseq
      %v1480 = vshrl.u32 %v1479, 7
      %v1481 = vsub.s32 %v1435, %v1480
      %v1482 = vrot.slane %v1148, %v1481
      %v1483 = vsel %vm1440, %v1482, %v1478
      %v1484 = vlaneseq
      %v1485 = vshrl.u32 %v1484, 7
      %v1486 = vsub.s32 %v1442, %v1485
      %v1487 = vrot.slane %v1156, %v1486
      %v1488 = vsel %vm1447, %v1487, %v1483
      %v1489 = vlaneseq
      %v1490 = vshrl.u32 %v1489, 7
      %v1491 = vsub.s32 %v1449, %v1490
      %v1492 = vrot.slane %v1164, %v1491
      %v1493 = vsel %vm1454, %v1492, %v1488
      %v1494 = vlaneseq
      %v1495 = vshrl.u32 %v1494, 7
      %v1496 = vsub.s32 %v1430, %v1495
      %v1497 = vrot.slane %v1172, %v1496
      %v1498 = vlaneseq
      %v1499 = vshrl.u32 %v1498, 7
      %v1500 = vsub.s32 %v1435, %v1499
      %v1501 = vrot.slane %v1180, %v1500
      %v1502 = vsel %vm1440, %v1501, %v1497
      %v1503 = vlaneseq
      %v1504 = vshrl.u32 %v1503, 7
      %v1505 = vsub.s32 %v1442, %v1504
      %v1506 = vrot.slane %v1188, %v1505
      %v1507 = vsel %vm1447, %v1506, %v1502
      %v1508 = vlaneseq
      %v1509 = vshrl.u32 %v1508, 7
      %v1510 = vsub.s32 %v1449, %v1509
      %v1511 = vrot.slane %v1196, %v1510
      %v1512 = vsel %vm1454, %v1511, %v1507
      %v1513 = vlaneseq
      %v1514 = vshrl.u32 %v1513, 7
      %v1515 = vsub.s32 %v1430, %v1514
      %v1516 = vrot.slane %v1204, %v1515
      %v1517 = vlaneseq
      %v1518 = vshrl.u32 %v1517, 7
      %v1519 = vsub.s32 %v1435, %v1518
      %v1520 = vrot.slane %v1212, %v1519
      %v1521 = vsel %vm1440, %v1520, %v1516
      %v1522 = vlaneseq
      %v1523 = vshrl.u32 %v1522, 7
      %v1524 = vsub.s32 %v1442, %v1523
      %v1525 = vrot.slane %v1220, %v1524
      %v1526 = vsel %vm1447, %v1525, %v1521
      %v1527 = vlaneseq
      %v1528 = vshrl.u32 %v1527, 7
      %v1529 = vsub.s32 %v1449, %v1528
      %v1530 = vrot.slane %v1228, %v1529
      %v1531 = vsel %vm1454, %v1530, %v1526
      %v1532 = vlaneseq
      %v1533 = vshrl.u32 %v1532, 7
      %v1534 = vsub.s32 %v1430, %v1533
      %v1535 = vrot.slane %v1236, %v1534
      %v1536 = vlaneseq
      %v1537 = vshrl.u32 %v1536, 7
      %v1538 = vsub.s32 %v1435, %v1537
      %v1539 = vrot.slane %v1244, %v1538
      %v1540 = vsel %vm1440, %v1539, %v1535
      %v1541 = vlaneseq
      %v1542 = vshrl.u32 %v1541, 7
      %v1543 = vsub.s32 %v1442, %v1542
      %v1544 = vrot.slane %v1252, %v1543
      %v1545 = vsel %vm1447, %v1544, %v1540
      %v1546 = vlaneseq
      %v1547 = vshrl.u32 %v1546, 7
      %v1548 = vsub.s32 %v1449, %v1547
      %v1549 = vrot.slane %v1260, %v1548
      %v1550 = vsel %vm1454, %v1549, %v1545
      %v1551 = vlaneseq
      %v1552 = vshrl.u32 %v1551, 7
      %v1553 = vsub.s32 %v1430, %v1552
      %v1554 = vrot.slane %v1268, %v1553
      %v1555 = vlaneseq
      %v1556 = vshrl.u32 %v1555, 7
      %v1557 = vsub.s32 %v1435, %v1556
      %v1558 = vrot.slane %v1276, %v1557
      %v1559 = vsel %vm1440, %v1558, %v1554
      %v1560 = vlaneseq
      %v1561 = vshrl.u32 %v1560, 7
      %v1562 = vsub.s32 %v1442, %v1561
      %v1563 = vrot.slane %v1284, %v1562
      %v1564 = vsel %vm1447, %v1563, %v1559
      %v1565 = vlaneseq
      %v1566 = vshrl.u32 %v1565, 7
      %v1567 = vsub.s32 %v1449, %v1566
      %v1568 = vrot.slane %v1292, %v1567
      %v1569 = vsel %vm1454, %v1568, %v1564
      %v1570 = vlaneseq
      %v1571 = vshrl.u32 %v1570, 7
      %v1572 = vsub.s32 %v1430, %v1571
      %v1573 = vrot.slane %v1300, %v1572
      %v1574 = vlaneseq
      %v1575 = vshrl.u32 %v1574, 7
      %v1576 = vsub.s32 %v1435, %v1575
      %v1577 = vrot.slane %v1308, %v1576
      %v1578 = vsel %vm1440, %v1577, %v1573
      %v1579 = vlaneseq
      %v1580 = vshrl.u32 %v1579, 7
      %v1581 = vsub.s32 %v1442, %v1580
      %v1582 = vrot.slane %v1316, %v1581
      %v1583 = vsel %vm1447, %v1582, %v1578
      %v1584 = vlaneseq
      %v1585 = vshrl.u32 %v1584, 7
      %v1586 = vsub.s32 %v1449, %v1585
      %v1587 = vrot.slane %v1324, %v1586
      %v1588 = vsel %vm1454, %v1587, %v1583
      %v1589 = vlaneseq
      %v1590 = vshrl.u32 %v1589, 7
      %v1591 = vsub.s32 %v1430, %v1590
      %v1592 = vrot.slane %v1332, %v1591
      %v1593 = vlaneseq
      %v1594 = vshrl.u32 %v1593, 7
      %v1595 = vsub.s32 %v1435, %v1594
      %v1596 = vrot.slane %v1340, %v1595
      %v1597 = vsel %vm1440, %v1596, %v1592
      %v1598 = vlaneseq
      %v1599 = vshrl.u32 %v1598, 7
      %v1600 = vsub.s32 %v1442, %v1599
      %v1601 = vrot.slane %v1348, %v1600
      %v1602 = vsel %vm1447, %v1601, %v1597
      %v1603 = vlaneseq
      %v1604 = vshrl.u32 %v1603, 7
      %v1605 = vsub.s32 %v1449, %v1604
      %v1606 = vrot.slane %v1356, %v1605
      %v1607 = vsel %vm1454, %v1606, %v1602
      %v1608 = vlaneseq
      %v1609 = vshrl.u32 %v1608, 7
      %v1610 = vsub.s32 %v1430, %v1609
      %v1611 = vrot.slane %v1364, %v1610
      %v1612 = vlaneseq
      %v1613 = vshrl.u32 %v1612, 7
      %v1614 = vsub.s32 %v1435, %v1613
      %v1615 = vrot.slane %v1372, %v1614
      %v1616 = vsel %vm1440, %v1615, %v1611
      %v1617 = vlaneseq
      %v1618 = vshrl.u32 %v1617, 7
      %v1619 = vsub.s32 %v1442, %v1618
      %v1620 = vrot.slane %v1380, %v1619
      %v1621 = vsel %vm1447, %v1620, %v1616
      %v1622 = vlaneseq
      %v1623 = vshrl.u32 %v1622, 7
      %v1624 = vsub.s32 %v1449, %v1623
      %v1625 = vrot.slane %v1388, %v1624
      %v1626 = vsel %vm1454, %v1625, %v1621
      %vm1627 = vcmask 1041409
      %v1628 = vsel %vm1627, %v1474, %v1455
      %vm1629 = vcmask 1042434
      %v1630 = vsel %vm1629, %v1493, %v1628
      %vm1631 = vcmask 1043459
      %v1632 = vsel %vm1631, %v1512, %v1630
      %vm1633 = vcmask 1044484
      %v1634 = vsel %vm1633, %v1531, %v1632
      %vm1635 = vcmask 1045509
      %v1636 = vsel %vm1635, %v1550, %v1634
      %vm1637 = vcmask 1046534
      %v1638 = vsel %vm1637, %v1569, %v1636
      %vm1639 = vcmask 1047559
      %v1640 = vsel %vm1639, %v1588, %v1638
      %v1641 = vsel %vm1627, %v1626, %v1607
      %vm1644 = vcmask 261120
      %v1645 = vsel %vm1644, %v1640, 0.0
      %1646 = vadd.xlane.f32.xlu0 %v1645
      %v1647 = vpop.xlane.xlu0 %1646
      %vm1648 = vcmask 254976
      %v1649 = vsel %vm1648, %v1641, 0.0
      %1650 = vadd.xlane.f32.xlu0 %v1649
      %v1651 = vpop.xlane.xlu0 %1650
      %v1652 = vld [vmem:[%s4] sm:$0xff]
      %v1653 = vld [vmem:[%s4 + $0x8] sm:$0x3]
      %v1654 = vadd.f32 %v1647, %v1652
      %v1655 = vadd.f32 %v1651, %v1653
      %vm1656 = vcmask 7168
      %1657 = vst.msk [vmem:[%s224] sm:$0xff] %vm1656, %v1654
      %vm1658 = vcmask 1024
      %1659 = vst.msk [vmem:[%s224 + $0x8] sm:$0x3] %vm1658, %v1655
      %p1660 = scmp.lt.s32.totalorder %s16, 1
      %s1661 = scalar_select %p1660, %s16, 1
      %s1662 = smul.addr %s1661, 2
      %s1663 = smul.addr %s1662, 8
      %s1664 = scalar_lea.vmem %s5, %s1663
      // Predicated region
      $region41: #{my_custom_model.1} parent=39 // pred_check
        %p1665 = pneg %p144
      $region42: #{my_custom_model.1} parent=39 // pred_check_branch
        %1667 = sbr.rel (%p1665) target = $region44
      $region43: #{my_custom_model.1} parent=39 // pred_region
        _
      $region44: #{my_custom_model.1} parent=39 // pred_fallthru
        _
    $region40: #{my_custom_model.1} parent=5 // pred_fallthru
      _
    %p1668 = scmp.le.s32.totalorder 2, %s11
    // Predicated region
    $region45: #{my_custom_model.1} parent=5 // pred_check
      %p1669 = pneg %p1668
    $region46: #{my_custom_model.1} parent=5 // pred_check_branch
      %1671 = sbr.rel (%p1669) target = $region48
    $region47: #{my_custom_model.1} parent=5 // pred_region
      %s1672 = ssub.s32 %s11, 2
      // Predicated region
      $region49: #{my_custom_model.1} parent=47 // pred_check
        %p1673 = pneg %p150
      $region50: #{my_custom_model.1} parent=47 // pred_check_branch
        %1675 = sbr.rel (%p1673) target = $region52
      $region51: #{my_custom_model.1} parent=47 // pred_region
        %p1676 = scmp.lt.s32.totalorder %s17, 1
        %s1677 = scalar_select %p1676, %s17, 1
        %s1678 = smul.addr %s1677, 2
        %s1679 = smul.addr %s1678, 8
        %s1680 = scalar_lea.vmem %s5, %s1679
      $region52: #{my_custom_model.1} parent=47 // pred_fallthru
        _
    $region48: #{my_custom_model.1} parent=5 // pred_fallthru
      _
  $region6: #{my_custom_model.1} parent=0 // loop_footer
    %s15 = sadd.s32 1, %s11
  $region7: #{my_custom_model.1} parent=0 // loop_footer_branch
    %10 = sbr.rel target = $region3
  $region8: #{my_custom_model.1} parent=0 // loop_exit
    _

</llo_original>
